<compile_context>
chip_gen: v5e
topology: v5e:2x2
jax: 0.10.0
libtpu: 0.0.40
codegen_flags: <defaults>
</compile_context>

<pallas_src>
import math

import jax
import jax.numpy as jnp
import numpy as np
from jax import lax
from jax.experimental import pallas as pl
from jax.experimental.pallas import tpu as pltpu

DROPOUT = 0.2      # eval-mode forward: dropout is identity
EPS = 1e-4         # TimeStepNorm eps (added to the std, like the PyTorch module)
LANE = 128         # channel dims are zero-padded to multiples of the lane width
SUB = 16           # bf16 sublane packing: time tiles / halo blocks align to this


def round_up(x, m):
    return ((x + m - 1) // m) * m


def cdiv(a, b):
    return -(-a // b)


# --------------------------------------------------------------------------- #
# Device defaults + single-buffering probe
# --------------------------------------------------------------------------- #
def _device_defaults():
    """Per-generation tile cap, scoped-VMEM limit, and elementwise math dtype."""
    try:
        kind = jax.devices()[0].device_kind.lower()
    except Exception:
        kind = ""
    if "v7" in kind:
        # 64 MiB physical VMEM per TensorCore: the large tile still fits easily
        # at these channel widths; leave headroom under the physical limit.
        return {"t_tile_max": 1024, "vmem_limit": 48 * 1024 * 1024,
                "elt": jnp.bfloat16}
    if "v6" in kind:
        return {"t_tile_max": 1024, "vmem_limit": 64 * 1024 * 1024,
                "elt": jnp.bfloat16}
    if "v5" in kind:
        # v5e: no bf16 VALU/EUP -> keep the norm/PReLU chain in f32, but carry
        # the inter-layer activation in bf16 so spilled intermediates halve.
        return {"t_tile_max": 1024, "vmem_limit": 64 * 1024 * 1024,
                "elt": jnp.float32}
    # unknown chip: conservative defaults
    return {"t_tile_max": 512, "vmem_limit": None, "elt": jnp.float32}


_SINGLE_BUFFER_OK = None


def _probe_kernel(x_ref, o_ref):
    o_ref[...] = x_ref[...] * 2.0


def _single_buffer_supported():
    """Probe once whether pipeline_mode=pl.Buffered(1) compiles on this runtime."""
    global _SINGLE_BUFFER_OK
    if _SINGLE_BUFFER_OK is None:
        try:
            spec = pl.BlockSpec((8, 128), lambda i: (0, 0),
                                pipeline_mode=pl.Buffered(1))
            fn = pl.pallas_call(
                _probe_kernel, grid=(2,), in_specs=[spec],
                out_specs=pl.BlockSpec((8, 128), lambda i: (0, 0)),
                out_shape=jax.ShapeDtypeStruct((8, 128), jnp.float32))
            jax.block_until_ready(fn(jnp.ones((8, 128), jnp.float32)))
            _SINGLE_BUFFER_OK = True
        except Exception:
            _SINGLE_BUFFER_OK = False
    return _SINGLE_BUFFER_OK


# --------------------------------------------------------------------------- #
# Kernel
# --------------------------------------------------------------------------- #
def make_stage_kernel(n_layers, halo, h_real, h_pad, elt):
    """ConvNetStage kernel.

    refs = [x_main, x_halo, w0, b0, (w_i, b_i, gamma_i, beta_i) * (n_layers-1),
            alphas (SMEM), out]
    """

    def kernel(*refs):
        x_main_ref, x_halo_ref, w0_ref, b0_ref = refs[:4]
        layer_refs = refs[4:-2]
        alphas_ref = refs[-2]
        out_ref = refs[-1]

        # ---- layer 0: wide Conv1d with the stride folded into lanes ----------
        # tap q = 0 comes straight from the aligned main block (zero-copy);
        # taps q >= 1 use a row-shifted window that crosses into the halo block.
        x_main = x_main_ref[0]                            # (t_tile, s*CP) bf16
        acc = jnp.dot(x_main, w0_ref[0], preferred_element_type=jnp.float32)
        for q in range(1, halo + 1):                      # halo <= 2, static unroll
            shifted = jnp.concatenate([x_main[q:], x_halo_ref[0, :q]], axis=0)
            acc = acc + jnp.dot(shifted, w0_ref[q],
                                preferred_element_type=jnp.float32)
        y = (acc + b0_ref[...]).astype(elt)
        a0 = alphas_ref[0].astype(elt)
        y = jnp.where(y >= 0, y, a0 * y)                  # PReLU (shared alpha)
        y = y.astype(jnp.bfloat16)                        # carried activation: bf16

        # ---- layers 1..: 1x1 Conv1d + TimeStepNorm + PReLU (+ Dropout == id) --
        for i in range(1, n_layers):
            w_ref, b_ref, g_ref, be_ref = layer_refs[4 * (i - 1): 4 * i]
            c, hp = h_real[i], h_pad[i]
            inv_c = 1.0 / float(c)

            z = jnp.dot(y, w_ref[...], preferred_element_type=jnp.float32)
            z = z + b_ref[...]

            # TimeStepNorm: population stats over the *real* channels per (n, t)
            # row (torch.std(unbiased=False); eps added to the std).  Stats stay
            # f32; the lane mask zeroes padded lanes so the two-pass variance is
            # exact (no E[x^2] - mean^2 cancellation).
            lane_mask = (lax.broadcasted_iota(jnp.int32, (1, hp), 1)
                         < c).astype(jnp.float32)
            mean = jnp.sum(z, axis=-1, keepdims=True) * inv_c
            zc = (z - mean) * lane_mask
            var = jnp.sum(zc * zc, axis=-1, keepdims=True) * inv_c
            inv_std = pl.reciprocal(jnp.sqrt(var) + EPS, approx=True)     # EUP

            # Elementwise tail in bf16 on v6e/v7x (f32 on v5e).  Padded lanes
            # return to exactly zero via gamma/beta padding.
            zn = zc.astype(elt) * inv_std.astype(elt)
            zn = g_ref[...].astype(elt) * zn + be_ref[...].astype(elt)
            a = alphas_ref[i].astype(elt)
            y = jnp.where(zn >= 0, zn, a * zn)
            # TODO(synk): training-mode Dropout(p=0.2) not replicated (eval id).
            y = y.astype(jnp.bfloat16)

        out_ref[0] = y                                    # lane-dense 128-wide vst

    return kernel


# --------------------------------------------------------------------------- #
# Parameters (synthetic, PyTorch-style init, packed into padded/stacked layouts)
# --------------------------------------------------------------------------- #
def init_stage_params(key, input_dim, fifo_len, hidden_dims, dec):
    K, s = fifo_len, dec
    cp_in = round_up(input_dim, LANE)
    halo = (K - 1) // s
    h_pad = [round_up(h, LANE) for h in hidden_dims]

    p = {"dec": s, "K": K, "halo": halo, "cp_in": cp_in,
         "h_real": list(hidden_dims), "h_pad": h_pad}

    # layer 0: wide conv packed for the stride-folded layout:
    # tap k of the torch weight W[h, c, k] lives at w0[k//s, (k%s)*cp_in + c, h].
    fan_in = input_dim * K
    bound = 1.0 / math.sqrt(fan_in)
    w0 = jnp.zeros((halo + 1, s * cp_in, h_pad[0]), jnp.float32)
    for k in range(K):
        q, j = divmod(k, s)
        key, sub = jax.random.split(key)
        wk = jax.random.uniform(sub, (input_dim, hidden_dims[0]),
                                jnp.float32, -bound, bound)
        w0 = w0.at[q, j * cp_in: j * cp_in + input_dim, :hidden_dims[0]].set(wk)
    key, sub = jax.random.split(key)
    b0 = jnp.zeros((1, h_pad[0]), jnp.float32).at[:, :hidden_dims[0]].set(
        jax.random.uniform(sub, (1, hidden_dims[0]), jnp.float32, -bound, bound))
    p["w0"] = w0.astype(jnp.bfloat16)
    p["b0"] = b0

    ws, bs, gs, bes = [], [], [], []
    for i in range(1, len(hidden_dims)):
        cin, cout = hidden_dims[i - 1], hidden_dims[i]
        bound = 1.0 / math.sqrt(cin)
        key, k1, k2 = jax.random.split(key, 3)
        w = jnp.zeros((h_pad[i - 1], h_pad[i]), jnp.float32).at[:cin, :cout].set(
            jax.random.uniform(k1, (cin, cout), jnp.float32, -bound, bound))
        b = jnp.zeros((1, h_pad[i]), jnp.float32).at[:, :cout].set(
            jax.random.uniform(k2, (1, cout), jnp.float32, -bound, bound))
        g = jnp.zeros((1, h_pad[i]), jnp.float32).at[:, :cout].set(1.0)
        be = jnp.zeros((1, h_pad[i]), jnp.float32)
        ws.append(w.astype(jnp.bfloat16))
        bs.append(b)
        gs.append(g)
        bes.append(be)
    p["ws"], p["bs"], p["gammas"], p["betas"] = ws, bs, gs, bes
    p["alphas"] = jnp.full((len(hidden_dims),), 0.25, jnp.float32)  # nn.PReLU init
    return p


# --------------------------------------------------------------------------- #
# Stage wrapper
# --------------------------------------------------------------------------- #
def _pick_time_tiles(T_out, N, s_cp, hp_max, hp_last, const_bytes, cfg):
    """Footprint-driven, balanced time tiling."""
    budget = (cfg["vmem_limit"] or 32 * 1024 * 1024) // 2  # pipelining headroom
    t_cap = max(SUB, min(cfg["t_tile_max"], round_up(T_out, SUB)))

    def footprint(t):
        io = (2 * t * s_cp * 2          # main input block, double buffered, bf16
              + 2 * SUB * s_cp * 2      # halo block, double buffered, bf16
              + 2 * t * hp_last * 2)    # output block, double buffered, bf16
        live = 5 * t * hp_max * 4       # rough bound on live f32 intermediates
        return io + live + const_bytes

    while t_cap > SUB and footprint(t_cap) > budget:
        t_cap = max(SUB, round_up(t_cap // 2, SUB))

    num_tiles = cdiv(T_out, t_cap)
    if N * num_tiles < 2 and T_out > SUB:
        num_tiles = 2                   # give both v7x TensorCores a tile
    t_tile = round_up(cdiv(T_out, num_tiles), SUB)  # balanced: no mostly-pad tile
    return t_tile, num_tiles


def run_stage(x_ntc, p, cfg):
    """One ConvNetStage forward.

    x_ntc: (N, T, CP_in) bf16, channels zero-padded to CP_in (multiple of 128).
    Returns (N, T_out, HP_last) bf16; padded channel lanes stay exactly zero.
    """
    N, T, cp_in = x_ntc.shape
    K, s, halo = p["K"], p["dec"], p["halo"]
    assert cp_in == p["cp_in"] and halo <= SUB

    # Conv1d(padding=K-1, stride=s): T_out = (T + K - 2) // s + 1
    T_out = (T + K - 2) // s + 1
    s_cp = s * cp_in
    hp_last = p["h_pad"][-1]

    consts = [p["w0"], p["b0"]] + p["ws"] + p["bs"] + p["gammas"] + p["betas"]
    const_bytes = sum(int(a.nbytes) for a in consts)
    t_tile, num_tiles = _pick_time_tiles(
        T_out, N, s_cp, max(p["h_pad"]), hp_last, const_bytes, cfg)

    merged_rows = num_tiles * t_tile + SUB         # +SUB: halo block of last tile
    L_pad = merged_rows * s
    assert L_pad >= (K - 1) + T                    # front conv pad + data fit
    assert merged_rows >= T_out + halo             # last tile's halo is in bounds

    # Zero padding doubles as the conv zero padding and tile/halo alignment; the
    # stride is folded into the lane axis by a free row-major reshape.
    xp = jnp.pad(x_ntc.astype(jnp.bfloat16),
                 ((0, 0), (K - 1, L_pad - (K - 1) - T), (0, 0)))
    xm = xp.reshape(N, merged_rows, s_cp)

    n_layers = len(p["h_real"])
    halo_blocks = t_tile // SUB
    single_ok = cfg.get("single_buffer", False)

    def const_spec(arr):
        # Grid-invariant operand: fetched once; single-buffered when supported.
        nd = arr.ndim
        idx = lambda n, t: (0,) * nd
        if single_ok:
            return pl.BlockSpec(arr.shape, idx, pipeline_mode=pl.Buffered(1))
        return pl.BlockSpec(arr.shape, idx)

    inputs = [xm, xm, p["w0"], p["b0"]]
    in_specs = [
        pl.BlockSpec((1, t_tile, s_cp), lambda n, t: (n, t, 0)),
        pl.BlockSpec((1, SUB, s_cp), lambda n, t: (n, (t + 1) * halo_blocks, 0)),
        const_spec(p["w0"]),
        const_spec(p["b0"]),
    ]
    for i in range(n_layers - 1):
        for arr in (p["ws"][i], p["bs"][i], p["gammas"][i], p["betas"][i]):
            inputs.append(arr)
            in_specs.append(const_spec(arr))
    inputs.append(p["alphas"])
    in_specs.append(pl.BlockSpec(memory_space=pltpu.MemorySpace.SMEM))

    compiler_kwargs = {"dimension_semantics": ("parallel", "parallel")}
    # TODO(synk): on v7x, verify in the trace that the (N, num_tiles) grid is
    #             split across both TensorCores; if not, switch the leading axis
    #             to pltpu.CORE_PARALLEL.
    if cfg["vmem_limit"]:
        compiler_kwargs["vmem_limit_bytes"] = cfg["vmem_limit"]

    out = pl.pallas_call(
        make_stage_kernel(n_layers, halo, p["h_real"], p["h_pad"], cfg["elt"]),
        grid=(N, num_tiles),
        in_specs=in_specs,
        out_specs=pl.BlockSpec((1, t_tile, hp_last), lambda n, t: (n, t, 0)),
        out_shape=jax.ShapeDtypeStruct((N, num_tiles * t_tile, hp_last),
                                       jnp.bfloat16),
        compiler_params=pltpu.CompilerParams(**compiler_kwargs),
    )(*inputs)
    # NOTE: T_out is usually not a multiple of 8, so this slice costs one small
    # XLA copy; it fuses into the next stage's pad.
    return out[:, :T_out, :]


# --------------------------------------------------------------------------- #
# Model
# --------------------------------------------------------------------------- #
class MultiStageConvNetPallas:
    def __init__(self, key, embedding_len, fifo_len, convnet_hidden_dims,
                 share_stages):
        self.fifo_len = fifo_len
        self.num_stages = len(convnet_hidden_dims)
        self.stage_params = []
        for ii in range(self.num_stages - share_stages):
            key, sk = jax.random.split(key)
            if ii == 0:
                input_dim, dec = embedding_len, 1
            else:
                input_dim, dec = convnet_hidden_dims[ii - 1][-1], 2
            self.stage_params.append(
                init_stage_params(sk, input_dim, fifo_len,
                                  convnet_hidden_dims[ii], dec))
        # Shared stages reuse the module (params AND stride) of the last
        # non-shared stage, exactly like the PyTorch ModuleList aliasing.
        shared = self.num_stages - share_stages - 1
        for _ in range(self.num_stages - share_stages, self.num_stages):
            self.stage_params.append(self.stage_params[shared])

        self.cfg = dict(_device_defaults())
        self.cfg["single_buffer"] = _single_buffer_supported()

    def __call__(self, x_nct):
        # x_nct: PyTorch layout (N, C, T)
        N, C, T = x_nct.shape
        cp = round_up(C, LANE)
        x = jnp.transpose(x_nct, (0, 2, 1)).astype(jnp.bfloat16)      # (N, T, C)
        x = jnp.pad(x, ((0, 0), (0, 0), (0, cp - C)))                 # lane-pad once
        stage_outputs = []
        for p in self.stage_params:
            x = run_stage(x, p, self.cfg)                             # (N,T_out,HP)
            h_last = p["h_real"][-1]
            # Stage outputs returned in the PyTorch (N, C, T) layout / f32.
            # TODO(synk): keep (N, T, C) bf16 if downstream allows, to avoid the
            #             extra per-stage HBM transpose + f32 upcast.
            stage_outputs.append(
                jnp.transpose(x[:, :, :h_last], (0, 2, 1)).astype(jnp.float32))
        return stage_outputs


# --------------------------------------------------------------------------- #
# Pure-JAX reference (same packed params, f32 math) for a sanity check
# --------------------------------------------------------------------------- #
def reference_forward(model, x_nct):
    N, C, T = x_nct.shape
    cp = round_up(C, LANE)
    x = jnp.transpose(x_nct, (0, 2, 1)).astype(jnp.bfloat16).astype(jnp.float32)
    x = jnp.pad(x, ((0, 0), (0, 0), (0, cp - C)))
    outs = []
    for p in model.stage_params:
        K, s, cp_in = p["K"], p["dec"], p["cp_in"]
        T = x.shape[1]
        T_out = (T + K - 2) // s + 1
        xp = jnp.pad(x, ((0, 0), (K - 1, K - 1), (0, 0)))
        w0 = p["w0"].astype(jnp.float32)
        acc = jnp.zeros((N, T_out, p["h_pad"][0]), jnp.float32)
        for k in range(K):
            q, j = divmod(k, s)
            wk = w0[q, j * cp_in:(j + 1) * cp_in, :]
            xk = xp[:, k: k + s * (T_out - 1) + 1: s, :]
            acc = acc + jnp.einsum("ntc,ch->nth", xk, wk)
        y = acc + p["b0"][None]
        y = jnp.where(y >= 0, y, p["alphas"][0] * y)
        for i in range(1, len(p["h_real"])):
            w = p["ws"][i - 1].astype(jnp.float32)
            z = jnp.einsum("nth,hk->ntk", y, w) + p["bs"][i - 1][None]
            c = p["h_real"][i]
            zr = z[..., :c]
            mean = jnp.mean(zr, -1, keepdims=True)
            std = jnp.sqrt(jnp.mean((zr - mean) ** 2, -1, keepdims=True))
            z = (z - mean) / (std + EPS)
            z = p["gammas"][i - 1][None] * z + p["betas"][i - 1][None]
            y = jnp.where(z >= 0, z, p["alphas"][i] * z)
        outs.append(jnp.transpose(y[:, :, :p["h_real"][-1]], (0, 2, 1)))
        x = y                          # padded lanes are zero -> feed next stage
    return outs


if __name__ == "__main__":
    key = jax.random.PRNGKey(0)
    kparam, kx = jax.random.split(key)

    embedding_len = 16
    fifo_len = 3
    convnet_hidden_dims = [[32, 32], [32, 32], [32, 32]]
    share_stages = 1
    N, T = 2, 16

    model = MultiStageConvNetPallas(
        kparam, embedding_len, fifo_len, convnet_hidden_dims, share_stages)

    x = jax.random.normal(kx, (N, embedding_len, T), jnp.float32)  # PyTorch NCL

    fwd = jax.jit(lambda inp: model(inp))
    outs = jax.block_until_ready(fwd(x))

    # shape sanity
    assert len(outs) == len(convnet_hidden_dims)
    assert outs[0].shape == (N, 32, T + fifo_len - 1)
    assert outs[1].shape == (N, 32, 10)
    assert outs[2].shape == (N, 32, 6)

    # numerical sanity vs. pure-JAX reference (loose tolerance: bf16 matmuls,
    # bf16 elementwise tail and approx reciprocal in the kernel vs f32 reference)
    refs = reference_forward(model, x)
    for o, r in zip(outs, refs):
        np.testing.assert_allclose(np.asarray(o), np.asarray(r),
                                   rtol=0.1, atol=0.1)

    print("KERNEL_OK")
</pallas_src>

<mosaic_0001>
module attributes {stable_mosaic.version = 11 : i64} {
  func.func @_probe_kernel(%arg0: i32, %arg1: memref<8x128xf32, #tpu.memory_space<vmem>>, %arg2: memref<8x128xf32, #tpu.memory_space<vmem>>) attributes {dimension_semantics = [#tpu.dimension_semantics<arbitrary>], iteration_bounds = array<i64: 2>, scalar_prefetch = 0 : i64, scratch_operands = 0 : i64, tpu.core_type = #tpu.core_type<tc>, window_params = [{pipeline_mode = #tpu.pipeline_mode<synchronous>, transform_indices = @transform_0, window_bounds = array<i64: 8, 128>}, {pipeline_mode = #tpu.pipeline_mode<synchronous>, transform_indices = @transform_1, window_bounds = array<i64: 8, 128>}]} {
    %c0 = arith.constant 0 : index
    %c0_0 = arith.constant 0 : index
    %0 = vector.load %arg1[%c0, %c0_0] : memref<8x128xf32, #tpu.memory_space<vmem>>, vector<8x128xf32>
    %cst = arith.constant 2.000000e+00 : f32
    %1 = vector.broadcast %cst : f32 to vector<8x128xf32>
    %2 = arith.mulf %0, %1 : vector<8x128xf32>
    %c0_1 = arith.constant 0 : index
    %c0_2 = arith.constant 0 : index
    %3 = vector.load %arg2[%c0_1, %c0_2] : memref<8x128xf32, #tpu.memory_space<vmem>>, vector<8x128xf32>
    tpu.vector_store %arg2[%c0_1, %c0_2], %2 {strides = array<i32>} : memref<8x128xf32, #tpu.memory_space<vmem>>, vector<8x128xf32>,
    return
  }
  func.func @transform_0(%arg0: i32) -> (i32, i32) {
    %c0_i32 = arith.constant 0 : i32
    %c0_i32_0 = arith.constant 0 : i32
    %c0_i32_1 = arith.constant 0 : i32
    return %c0_i32, %c0_i32_0 : i32, i32
  }
  func.func @transform_1(%arg0: i32) -> (i32, i32) {
    %c0_i32 = arith.constant 0 : i32
    %c0_i32_0 = arith.constant 0 : i32
    %c0_i32_1 = arith.constant 0 : i32
    return %c0_i32, %c0_i32_0 : i32, i32
  }
}

module attributes {stable_mosaic.version = 11 : i64} {
  func.func @kernel(%arg0: i32, %arg1: i32, %arg2: memref<1x16x256xbf16, #tpu.memory_space<vmem>>, %arg3: memref<1x16x256xbf16, #tpu.memory_space<vmem>>, %arg4: memref<2x256x128xbf16, #tpu.memory_space<vmem>>, %arg5: memref<1x128xf32, #tpu.memory_space<vmem>>, %arg6: memref<128x128xbf16, #tpu.memory_space<vmem>>, %arg7: memref<1x128xf32, #tpu.memory_space<vmem>>, %arg8: memref<1x128xf32, #tpu.memory_space<vmem>>, %arg9: memref<1x128xf32, #tpu.memory_space<vmem>>, %arg10: memref<2xf32, #tpu.memory_space<smem>>, %arg11: memref<1x16x128xbf16, #tpu.memory_space<vmem>>) attributes {dimension_semantics = [#tpu.dimension_semantics<parallel>, #tpu.dimension_semantics<parallel>], iteration_bounds = array<i64: 2, 1>, scalar_prefetch = 0 : i64, scratch_operands = 0 : i64, tpu.core_type = #tpu.core_type<tc>, window_params = [{transform_indices = @transform_0, window_bounds = array<i64: 1, 16, 256>}, {transform_indices = @transform_1, window_bounds = array<i64: 1, 16, 256>}, {pipeline_mode = #tpu.pipeline_mode<synchronous>, transform_indices = @transform_2, window_bounds = array<i64: 2, 256, 128>}, {pipeline_mode = #tpu.pipeline_mode<synchronous>, transform_indices = @transform_3, window_bounds = array<i64: 1, 128>}, {pipeline_mode = #tpu.pipeline_mode<synchronous>, transform_indices = @transform_4, window_bounds = array<i64: 128, 128>}, {pipeline_mode = #tpu.pipeline_mode<synchronous>, transform_indices = @transform_5, window_bounds = array<i64: 1, 128>}, {pipeline_mode = #tpu.pipeline_mode<synchronous>, transform_indices = @transform_6, window_bounds = array<i64: 1, 128>}, {pipeline_mode = #tpu.pipeline_mode<synchronous>, transform_indices = @transform_7, window_bounds = array<i64: 1, 128>}, {transform_indices = @transform_8, window_bounds = array<i64: 2>}, {transform_indices = @transform_9, window_bounds = array<i64: 1, 16, 128>}]} {
    %c0 = arith.constant 0 : index
    %c0_0 = arith.constant 0 : index
    %c0_1 = arith.constant 0 : index
    %0 = vector.load %arg2[%c0, %c0_0, %c0_1] : memref<1x16x256xbf16, #tpu.memory_space<vmem>>, vector<1x16x256xbf16>
    %1 = vector.shape_cast %0 : vector<1x16x256xbf16> to vector<16x256xbf16>
    %c0_2 = arith.constant 0 : index
    %c0_3 = arith.constant 0 : index
    %c0_4 = arith.constant 0 : index
    %2 = vector.load %arg4[%c0_2, %c0_3, %c0_4] : memref<2x256x128xbf16, #tpu.memory_space<vmem>>, vector<1x256x128xbf16>
    %3 = vector.shape_cast %2 : vector<1x256x128xbf16> to vector<256x128xbf16>
    %cst = arith.constant dense<0.000000e+00> : vector<16x128xf32>
    %4 = tpu.matmul %1, %3, %cst {dimension_numbers = #tpu.dot_dimension_numbers<[1], [0], [0], [1], [0, 0, 1, 1], [], []>} : vector<16x256xbf16>, vector<256x128xbf16>, vector<16x128xf32> -> vector<16x128xf32>
    %5 = vector.extract_strided_slice %1 {offsets = [1, 0], sizes = [15, 256], strides = [1, 1]} : vector<16x256xbf16> to vector<15x256xbf16>
    %c0_5 = arith.constant 0 : index
    %c0_6 = arith.constant 0 : index
    %c0_7 = arith.constant 0 : index
    %6 = vector.load %arg3[%c0_5, %c0_6, %c0_7] : memref<1x16x256xbf16, #tpu.memory_space<vmem>>, vector<1x1x256xbf16>
    %7 = vector.shape_cast %6 : vector<1x1x256xbf16> to vector<1x256xbf16>
    %8 = tpu.concatenate %5, %7 in 0 : vector<15x256xbf16>, vector<1x256xbf16> -> vector<16x256xbf16>
    %c1 = arith.constant 1 : index
    %c0_8 = arith.constant 0 : index
    %c0_9 = arith.constant 0 : index
    %9 = vector.load %arg4[%c1, %c0_8, %c0_9] : memref<2x256x128xbf16, #tpu.memory_space<vmem>>, vector<1x256x128xbf16>
    %10 = vector.shape_cast %9 : vector<1x256x128xbf16> to vector<256x128xbf16>
    %cst_10 = arith.constant dense<0.000000e+00> : vector<16x128xf32>
    %11 = tpu.matmul %8, %10, %cst_10 {dimension_numbers = #tpu.dot_dimension_numbers<[1], [0], [0], [1], [0, 0, 1, 1], [], []>} : vector<16x256xbf16>, vector<256x128xbf16>, vector<16x128xf32> -> vector<16x128xf32>
    %12 = arith.addf %4, %11 : vector<16x128xf32>
    %c0_11 = arith.constant 0 : index
    %c0_12 = arith.constant 0 : index
    %13 = vector.load %arg5[%c0_11, %c0_12] : memref<1x128xf32, #tpu.memory_space<vmem>>, vector<1x128xf32>
    %14 = vector.broadcast %13 : vector<1x128xf32> to vector<16x128xf32>
    %15 = arith.addf %12, %14 : vector<16x128xf32>
    %c0_13 = arith.constant 0 : index
    %16 = memref.load %arg10[%c0_13] : memref<2xf32, #tpu.memory_space<smem>>
    %cst_14 = arith.constant 0.000000e+00 : f32
    %17 = vector.broadcast %cst_14 : f32 to vector<16x128xf32>
    %18 = arith.cmpf oge, %15, %17 : vector<16x128xf32>
    %19 = vector.broadcast %16 : f32 to vector<16x128xf32>
    %20 = arith.mulf %19, %15 : vector<16x128xf32>
    %21 = arith.select %18, %15, %20 : vector<16x128xi1>, vector<16x128xf32>
    %22 = arith.truncf %21 : vector<16x128xf32> to vector<16x128xbf16>
    %c0_15 = arith.constant 0 : index
    %c0_16 = arith.constant 0 : index
    %23 = vector.load %arg6[%c0_15, %c0_16] : memref<128x128xbf16, #tpu.memory_space<vmem>>, vector<128x128xbf16>
    %cst_17 = arith.constant dense<0.000000e+00> : vector<16x128xf32>
    %24 = tpu.matmul %22, %23, %cst_17 {dimension_numbers = #tpu.dot_dimension_numbers<[1], [0], [0], [1], [0, 0, 1, 1], [], []>} : vector<16x128xbf16>, vector<128x128xbf16>, vector<16x128xf32> -> vector<16x128xf32>
    %c0_18 = arith.constant 0 : index
    %c0_19 = arith.constant 0 : index
    %25 = vector.load %arg7[%c0_18, %c0_19] : memref<1x128xf32, #tpu.memory_space<vmem>>, vector<1x128xf32>
    %26 = vector.broadcast %25 : vector<1x128xf32> to vector<16x128xf32>
    %27 = arith.addf %24, %26 : vector<16x128xf32>
    %28 = tpu.iota {dimensions = array<i32: 1>} : vector<1x128xi32>
    %c32_i32 = arith.constant 32 : i32
    %29 = vector.broadcast %c32_i32 : i32 to vector<1x128xi32>
    %30 = arith.cmpi slt, %28, %29 : vector<1x128xi32>
    %31 = arith.extui %30 : vector<1x128xi1> to vector<1x128xi32>
    %32 = arith.sitofp %31 : vector<1x128xi32> to vector<1x128xf32>
    %cst_20 = arith.constant dense<0.000000e+00> : vector<16xf32>
    %33 = vector.multi_reduction <add>, %27, %cst_20 [1] : vector<16x128xf32> to vector<16xf32>
    %34 = vector.shape_cast %33 : vector<16xf32> to vector<16x1xf32>
    %cst_21 = arith.constant 3.125000e-02 : f32
    %35 = vector.broadcast %cst_21 : f32 to vector<16x1xf32>
    %36 = arith.mulf %34, %35 : vector<16x1xf32>
    %37 = vector.broadcast %36 : vector<16x1xf32> to vector<16x128xf32>
    %38 = arith.subf %27, %37 : vector<16x128xf32>
    %39 = vector.broadcast %32 : vector<1x128xf32> to vector<16x128xf32>
    %40 = arith.mulf %38, %39 : vector<16x128xf32>
    %41 = arith.mulf %40, %40 : vector<16x128xf32>
    %cst_22 = arith.constant dense<0.000000e+00> : vector<16xf32>
    %42 = vector.multi_reduction <add>, %41, %cst_22 [1] : vector<16x128xf32> to vector<16xf32>
    %43 = vector.shape_cast %42 : vector<16xf32> to vector<16x1xf32>
    %cst_23 = arith.constant 3.125000e-02 : f32
    %44 = vector.broadcast %cst_23 : f32 to vector<16x1xf32>
    %45 = arith.mulf %43, %44 : vector<16x1xf32>
    %46 = math.sqrt %45 : vector<16x1xf32>
    %cst_24 = arith.constant 9.99999974E-5 : f32
    %47 = vector.broadcast %cst_24 : f32 to vector<16x1xf32>
    %48 = arith.addf %46, %47 : vector<16x1xf32>
    %49 = tpu.reciprocal %48 {approx = true} : vector<16x1xf32> -> vector<16x1xf32>
    %50 = vector.broadcast %49 : vector<16x1xf32> to vector<16x128xf32>
    %51 = arith.mulf %40, %50 : vector<16x128xf32>
    %c0_25 = arith.constant 0 : index
    %c0_26 = arith.constant 0 : index
    %52 = vector.load %arg8[%c0_25, %c0_26] : memref<1x128xf32, #tpu.memory_space<vmem>>, vector<1x128xf32>
    %53 = vector.broadcast %52 : vector<1x128xf32> to vector<16x128xf32>
    %54 = arith.mulf %53, %51 : vector<16x128xf32>
    %c0_27 = arith.constant 0 : index
    %c0_28 = arith.constant 0 : index
    %55 = vector.load %arg9[%c0_27, %c0_28] : memref<1x128xf32, #tpu.memory_space<vmem>>, vector<1x128xf32>
    %56 = vector.broadcast %55 : vector<1x128xf32> to vector<16x128xf32>
    %57 = arith.addf %54, %56 : vector<16x128xf32>
    %c1_29 = arith.constant 1 : index
    %58 = memref.load %arg10[%c1_29] : memref<2xf32, #tpu.memory_space<smem>>
    %cst_30 = arith.constant 0.000000e+00 : f32
    %59 = vector.broadcast %cst_30 : f32 to vector<16x128xf32>
    %60 = arith.cmpf oge, %57, %59 : vector<16x128xf32>
    %61 = vector.broadcast %58 : f32 to vector<16x128xf32>
    %62 = arith.mulf %61, %57 : vector<16x128xf32>
    %63 = arith.select %60, %57, %62 : vector<16x128xi1>, vector<16x128xf32>
    %64 = arith.truncf %63 : vector<16x128xf32> to vector<16x128xbf16>
    %c0_31 = arith.constant 0 : index
    %c0_32 = arith.constant 0 : index
    %c0_33 = arith.constant 0 : index
    %65 = vector.load %arg11[%c0_31, %c0_32, %c0_33] : memref<1x16x128xbf16, #tpu.memory_space<vmem>>, vector<1x16x128xbf16>
    %66 = vector.shape_cast %65 : vector<1x16x128xbf16> to vector<16x128xbf16>
    %67 = vector.shape_cast %64 : vector<16x128xbf16> to vector<1x16x128xbf16>
    tpu.vector_store %arg11[%c0_31, %c0_32, %c0_33], %67 {strides = array<i32>} : memref<1x16x128xbf16, #tpu.memory_space<vmem>>, vector<1x16x128xbf16>,
    return
  }
  func.func @transform_0(%arg0: i32, %arg1: i32) -> (i32, i32, i32) {
    %c0_i32 = arith.constant 0 : i32
    %c0_i32_0 = arith.constant 0 : i32
    return %arg0, %arg1, %c0_i32 : i32, i32, i32
  }
  func.func @transform_1(%arg0: i32, %arg1: i32) -> (i32, i32, i32) {
    %c1_i32 = arith.constant 1 : i32
    %0 = arith.addi %arg1, %c1_i32 : i32
    %c1_i32_0 = arith.constant 1 : i32
    %1 = arith.muli %0, %c1_i32_0 : i32
    %c0_i32 = arith.constant 0 : i32
    %c0_i32_1 = arith.constant 0 : i32
    return %arg0, %1, %c0_i32 : i32, i32, i32
  }
  func.func @transform_2(%arg0: i32, %arg1: i32) -> (i32, i32, i32) {
    %c0_i32 = arith.constant 0 : i32
    %c0_i32_0 = arith.constant 0 : i32
    %c0_i32_1 = arith.constant 0 : i32
    %c0_i32_2 = arith.constant 0 : i32
    return %c0_i32, %c0_i32_0, %c0_i32_1 : i32, i32, i32
  }
  func.func @transform_3(%arg0: i32, %arg1: i32) -> (i32, i32) {
    %c0_i32 = arith.constant 0 : i32
    %c0_i32_0 = arith.constant 0 : i32
    %c0_i32_1 = arith.constant 0 : i32
    return %c0_i32, %c0_i32_0 : i32, i32
  }
  func.func @transform_4(%arg0: i32, %arg1: i32) -> (i32, i32) {
    %c0_i32 = arith.constant 0 : i32
    %c0_i32_0 = arith.constant 0 : i32
    %c0_i32_1 = arith.constant 0 : i32
    return %c0_i32, %c0_i32_0 : i32, i32
  }
  func.func @transform_5(%arg0: i32, %arg1: i32) -> (i32, i32) {
    %c0_i32 = arith.constant 0 : i32
    %c0_i32_0 = arith.constant 0 : i32
    %c0_i32_1 = arith.constant 0 : i32
    return %c0_i32, %c0_i32_0 : i32, i32
  }
  func.func @transform_6(%arg0: i32, %arg1: i32) -> (i32, i32) {
    %c0_i32 = arith.constant 0 : i32
    %c0_i32_0 = arith.constant 0 : i32
    %c0_i32_1 = arith.constant 0 : i32
    return %c0_i32, %c0_i32_0 : i32, i32
  }
  func.func @transform_7(%arg0: i32, %arg1: i32) -> (i32, i32) {
    %c0_i32 = arith.constant 0 : i32
    %c0_i32_0 = arith.constant 0 : i32
    %c0_i32_1 = arith.constant 0 : i32
    return %c0_i32, %c0_i32_0 : i32, i32
  }
  func.func @transform_8(%arg0: i32, %arg1: i32) -> i32 {
    %c0_i32 = arith.constant 0 : i32
    %c0_i32_0 = arith.constant 0 : i32
    return %c0_i32 : i32
  }
  func.func @transform_9(%arg0: i32, %arg1: i32) -> (i32, i32, i32) {
    %c0_i32 = arith.constant 0 : i32
    %c0_i32_0 = arith.constant 0 : i32
    return %arg0, %arg1, %c0_i32 : i32, i32, i32
  }
}

module attributes {stable_mosaic.version = 11 : i64} {
  func.func @kernel(%arg0: i32, %arg1: i32, %arg2: memref<1x32x128xbf16, #tpu.memory_space<vmem>>, %arg3: memref<1x16x128xbf16, #tpu.memory_space<vmem>>, %arg4: memref<3x128x128xbf16, #tpu.memory_space<vmem>>, %arg5: memref<1x128xf32, #tpu.memory_space<vmem>>, %arg6: memref<128x128xbf16, #tpu.memory_space<vmem>>, %arg7: memref<1x128xf32, #tpu.memory_space<vmem>>, %arg8: memref<1x128xf32, #tpu.memory_space<vmem>>, %arg9: memref<1x128xf32, #tpu.memory_space<vmem>>, %arg10: memref<2xf32, #tpu.memory_space<smem>>, %arg11: memref<1x32x128xbf16, #tpu.memory_space<vmem>>) attributes {dimension_semantics = [#tpu.dimension_semantics<parallel>, #tpu.dimension_semantics<parallel>], iteration_bounds = array<i64: 2, 1>, scalar_prefetch = 0 : i64, scratch_operands = 0 : i64, tpu.core_type = #tpu.core_type<tc>, window_params = [{transform_indices = @transform_0, window_bounds = array<i64: 1, 32, 128>}, {transform_indices = @transform_1, window_bounds = array<i64: 1, 16, 128>}, {pipeline_mode = #tpu.pipeline_mode<synchronous>, transform_indices = @transform_2, window_bounds = array<i64: 3, 128, 128>}, {pipeline_mode = #tpu.pipeline_mode<synchronous>, transform_indices = @transform_3, window_bounds = array<i64: 1, 128>}, {pipeline_mode = #tpu.pipeline_mode<synchronous>, transform_indices = @transform_4, window_bounds = array<i64: 128, 128>}, {pipeline_mode = #tpu.pipeline_mode<synchronous>, transform_indices = @transform_5, window_bounds = array<i64: 1, 128>}, {pipeline_mode = #tpu.pipeline_mode<synchronous>, transform_indices = @transform_6, window_bounds = array<i64: 1, 128>}, {pipeline_mode = #tpu.pipeline_mode<synchronous>, transform_indices = @transform_7, window_bounds = array<i64: 1, 128>}, {transform_indices = @transform_8, window_bounds = array<i64: 2>}, {transform_indices = @transform_9, window_bounds = array<i64: 1, 32, 128>}]} {
    %c0 = arith.constant 0 : index
    %c0_0 = arith.constant 0 : index
    %c0_1 = arith.constant 0 : index
    %0 = vector.load %arg2[%c0, %c0_0, %c0_1] : memref<1x32x128xbf16, #tpu.memory_space<vmem>>, vector<1x32x128xbf16>
    %1 = vector.shape_cast %0 : vector<1x32x128xbf16> to vector<32x128xbf16>
    %c0_2 = arith.constant 0 : index
    %c0_3 = arith.constant 0 : index
    %c0_4 = arith.constant 0 : index
    %2 = vector.load %arg4[%c0_2, %c0_3, %c0_4] : memref<3x128x128xbf16, #tpu.memory_space<vmem>>, vector<1x128x128xbf16>
    %3 = vector.shape_cast %2 : vector<1x128x128xbf16> to vector<128x128xbf16>
    %cst = arith.constant dense<0.000000e+00> : vector<32x128xf32>
    %4 = tpu.matmul %1, %3, %cst {dimension_numbers = #tpu.dot_dimension_numbers<[1], [0], [0], [1], [0, 0, 1, 1], [], []>} : vector<32x128xbf16>, vector<128x128xbf16>, vector<32x128xf32> -> vector<32x128xf32>
    %5 = vector.extract_strided_slice %1 {offsets = [1, 0], sizes = [31, 128], strides = [1, 1]} : vector<32x128xbf16> to vector<31x128xbf16>
    %c0_5 = arith.constant 0 : index
    %c0_6 = arith.constant 0 : index
    %c0_7 = arith.constant 0 : index
    %6 = vector.load %arg3[%c0_5, %c0_6, %c0_7] : memref<1x16x128xbf16, #tpu.memory_space<vmem>>, vector<1x1x128xbf16>
    %7 = vector.shape_cast %6 : vector<1x1x128xbf16> to vector<1x128xbf16>
    %8 = tpu.concatenate %5, %7 in 0 : vector<31x128xbf16>, vector<1x128xbf16> -> vector<32x128xbf16>
    %c1 = arith.constant 1 : index
    %c0_8 = arith.constant 0 : index
    %c0_9 = arith.constant 0 : index
    %9 = vector.load %arg4[%c1, %c0_8, %c0_9] : memref<3x128x128xbf16, #tpu.memory_space<vmem>>, vector<1x128x128xbf16>
    %10 = vector.shape_cast %9 : vector<1x128x128xbf16> to vector<128x128xbf16>
    %cst_10 = arith.constant dense<0.000000e+00> : vector<32x128xf32>
    %11 = tpu.matmul %8, %10, %cst_10 {dimension_numbers = #tpu.dot_dimension_numbers<[1], [0], [0], [1], [0, 0, 1, 1], [], []>} : vector<32x128xbf16>, vector<128x128xbf16>, vector<32x128xf32> -> vector<32x128xf32>
    %12 = arith.addf %4, %11 : vector<32x128xf32>
    %13 = vector.extract_strided_slice %1 {offsets = [2, 0], sizes = [30, 128], strides = [1, 1]} : vector<32x128xbf16> to vector<30x128xbf16>
    %c0_11 = arith.constant 0 : index
    %c0_12 = arith.constant 0 : index
    %c0_13 = arith.constant 0 : index
    %14 = vector.load %arg3[%c0_11, %c0_12, %c0_13] : memref<1x16x128xbf16, #tpu.memory_space<vmem>>, vector<1x2x128xbf16>
    %15 = vector.shape_cast %14 : vector<1x2x128xbf16> to vector<2x128xbf16>
    %16 = tpu.concatenate %13, %15 in 0 : vector<30x128xbf16>, vector<2x128xbf16> -> vector<32x128xbf16>
    %c2 = arith.constant 2 : index
    %c0_14 = arith.constant 0 : index
    %c0_15 = arith.constant 0 : index
    %17 = vector.load %arg4[%c2, %c0_14, %c0_15] : memref<3x128x128xbf16, #tpu.memory_space<vmem>>, vector<1x128x128xbf16>
    %18 = vector.shape_cast %17 : vector<1x128x128xbf16> to vector<128x128xbf16>
    %cst_16 = arith.constant dense<0.000000e+00> : vector<32x128xf32>
    %19 = tpu.matmul %16, %18, %cst_16 {dimension_numbers = #tpu.dot_dimension_numbers<[1], [0], [0], [1], [0, 0, 1, 1], [], []>} : vector<32x128xbf16>, vector<128x128xbf16>, vector<32x128xf32> -> vector<32x128xf32>
    %20 = arith.addf %12, %19 : vector<32x128xf32>
    %c0_17 = arith.constant 0 : index
    %c0_18 = arith.constant 0 : index
    %21 = vector.load %arg5[%c0_17, %c0_18] : memref<1x128xf32, #tpu.memory_space<vmem>>, vector<1x128xf32>
    %22 = vector.broadcast %21 : vector<1x128xf32> to vector<32x128xf32>
    %23 = arith.addf %20, %22 : vector<32x128xf32>
    %c0_19 = arith.constant 0 : index
    %24 = memref.load %arg10[%c0_19] : memref<2xf32, #tpu.memory_space<smem>>
    %cst_20 = arith.constant 0.000000e+00 : f32
    %25 = vector.broadcast %cst_20 : f32 to vector<32x128xf32>
    %26 = arith.cmpf oge, %23, %25 : vector<32x128xf32>
    %27 = vector.broadcast %24 : f32 to vector<32x128xf32>
    %28 = arith.mulf %27, %23 : vector<32x128xf32>
    %29 = arith.select %26, %23, %28 : vector<32x128xi1>, vector<32x128xf32>
    %30 = arith.truncf %29 : vector<32x128xf32> to vector<32x128xbf16>
    %c0_21 = arith.constant 0 : index
    %c0_22 = arith.constant 0 : index
    %31 = vector.load %arg6[%c0_21, %c0_22] : memref<128x128xbf16, #tpu.memory_space<vmem>>, vector<128x128xbf16>
    %cst_23 = arith.constant dense<0.000000e+00> : vector<32x128xf32>
    %32 = tpu.matmul %30, %31, %cst_23 {dimension_numbers = #tpu.dot_dimension_numbers<[1], [0], [0], [1], [0, 0, 1, 1], [], []>} : vector<32x128xbf16>, vector<128x128xbf16>, vector<32x128xf32> -> vector<32x128xf32>
    %c0_24 = arith.constant 0 : index
    %c0_25 = arith.constant 0 : index
    %33 = vector.load %arg7[%c0_24, %c0_25] : memref<1x128xf32, #tpu.memory_space<vmem>>, vector<1x128xf32>
    %34 = vector.broadcast %33 : vector<1x128xf32> to vector<32x128xf32>
    %35 = arith.addf %32, %34 : vector<32x128xf32>
    %36 = tpu.iota {dimensions = array<i32: 1>} : vector<1x128xi32>
    %c32_i32 = arith.constant 32 : i32
    %37 = vector.broadcast %c32_i32 : i32 to vector<1x128xi32>
    %38 = arith.cmpi slt, %36, %37 : vector<1x128xi32>
    %39 = arith.extui %38 : vector<1x128xi1> to vector<1x128xi32>
    %40 = arith.sitofp %39 : vector<1x128xi32> to vector<1x128xf32>
    %cst_26 = arith.constant dense<0.000000e+00> : vector<32xf32>
    %41 = vector.multi_reduction <add>, %35, %cst_26 [1] : vector<32x128xf32> to vector<32xf32>
    %42 = vector.shape_cast %41 : vector<32xf32> to vector<32x1xf32>
    %cst_27 = arith.constant 3.125000e-02 : f32
    %43 = vector.broadcast %cst_27 : f32 to vector<32x1xf32>
    %44 = arith.mulf %42, %43 : vector<32x1xf32>
    %45 = vector.broadcast %44 : vector<32x1xf32> to vector<32x128xf32>
    %46 = arith.subf %35, %45 : vector<32x128xf32>
    %47 = vector.broadcast %40 : vector<1x128xf32> to vector<32x128xf32>
    %48 = arith.mulf %46, %47 : vector<32x128xf32>
    %49 = arith.mulf %48, %48 : vector<32x128xf32>
    %cst_28 = arith.constant dense<0.000000e+00> : vector<32xf32>
    %50 = vector.multi_reduction <add>, %49, %cst_28 [1] : vector<32x128xf32> to vector<32xf32>
    %51 = vector.shape_cast %50 : vector<32xf32> to vector<32x1xf32>
    %cst_29 = arith.constant 3.125000e-02 : f32
    %52 = vector.broadcast %cst_29 : f32 to vector<32x1xf32>
    %53 = arith.mulf %51, %52 : vector<32x1xf32>
    %54 = math.sqrt %53 : vector<32x1xf32>
    %cst_30 = arith.constant 9.99999974E-5 : f32
    %55 = vector.broadcast %cst_30 : f32 to vector<32x1xf32>
    %56 = arith.addf %54, %55 : vector<32x1xf32>
    %57 = tpu.reciprocal %56 {approx = true} : vector<32x1xf32> -> vector<32x1xf32>
    %58 = vector.broadcast %57 : vector<32x1xf32> to vector<32x128xf32>
    %59 = arith.mulf %48, %58 : vector<32x128xf32>
    %c0_31 = arith.constant 0 : index
    %c0_32 = arith.constant 0 : index
    %60 = vector.load %arg8[%c0_31, %c0_32] : memref<1x128xf32, #tpu.memory_space<vmem>>, vector<1x128xf32>
    %61 = vector.broadcast %60 : vector<1x128xf32> to vector<32x128xf32>
    %62 = arith.mulf %61, %59 : vector<32x128xf32>
    %c0_33 = arith.constant 0 : index
    %c0_34 = arith.constant 0 : index
    %63 = vector.load %arg9[%c0_33, %c0_34] : memref<1x128xf32, #tpu.memory_space<vmem>>, vector<1x128xf32>
    %64 = vector.broadcast %63 : vector<1x128xf32> to vector<32x128xf32>
    %65 = arith.addf %62, %64 : vector<32x128xf32>
    %c1_35 = arith.constant 1 : index
    %66 = memref.load %arg10[%c1_35] : memref<2xf32, #tpu.memory_space<smem>>
    %cst_36 = arith.constant 0.000000e+00 : f32
    %67 = vector.broadcast %cst_36 : f32 to vector<32x128xf32>
    %68 = arith.cmpf oge, %65, %67 : vector<32x128xf32>
    %69 = vector.broadcast %66 : f32 to vector<32x128xf32>
    %70 = arith.mulf %69, %65 : vector<32x128xf32>
    %71 = arith.select %68, %65, %70 : vector<32x128xi1>, vector<32x128xf32>
    %72 = arith.truncf %71 : vector<32x128xf32> to vector<32x128xbf16>
    %c0_37 = arith.constant 0 : index
    %c0_38 = arith.constant 0 : index
    %c0_39 = arith.constant 0 : index
    %73 = vector.load %arg11[%c0_37, %c0_38, %c0_39] : memref<1x32x128xbf16, #tpu.memory_space<vmem>>, vector<1x32x128xbf16>
    %74 = vector.shape_cast %73 : vector<1x32x128xbf16> to vector<32x128xbf16>
    %75 = vector.shape_cast %72 : vector<32x128xbf16> to vector<1x32x128xbf16>
    tpu.vector_store %arg11[%c0_37, %c0_38, %c0_39], %75 {strides = array<i32>} : memref<1x32x128xbf16, #tpu.memory_space<vmem>>, vector<1x32x128xbf16>,
    return
  }
  func.func @transform_0(%arg0: i32, %arg1: i32) -> (i32, i32, i32) {
    %c0_i32 = arith.constant 0 : i32
    %c0_i32_0 = arith.constant 0 : i32
    return %arg0, %arg1, %c0_i32 : i32, i32, i32
  }
  func.func @transform_1(%arg0: i32, %arg1: i32) -> (i32, i32, i32) {
    %c1_i32 = arith.constant 1 : i32
    %0 = arith.addi %arg1, %c1_i32 : i32
    %c2_i32 = arith.constant 2 : i32
    %1 = arith.muli %0, %c2_i32 : i32
    %c0_i32 = arith.constant 0 : i32
    %c0_i32_0 = arith.constant 0 : i32
    return %arg0, %1, %c0_i32 : i32, i32, i32
  }
  func.func @transform_2(%arg0: i32, %arg1: i32) -> (i32, i32, i32) {
    %c0_i32 = arith.constant 0 : i32
    %c0_i32_0 = arith.constant 0 : i32
    %c0_i32_1 = arith.constant 0 : i32
    %c0_i32_2 = arith.constant 0 : i32
    return %c0_i32, %c0_i32_0, %c0_i32_1 : i32, i32, i32
  }
  func.func @transform_3(%arg0: i32, %arg1: i32) -> (i32, i32) {
    %c0_i32 = arith.constant 0 : i32
    %c0_i32_0 = arith.constant 0 : i32
    %c0_i32_1 = arith.constant 0 : i32
    return %c0_i32, %c0_i32_0 : i32, i32
  }
  func.func @transform_4(%arg0: i32, %arg1: i32) -> (i32, i32) {
    %c0_i32 = arith.constant 0 : i32
    %c0_i32_0 = arith.constant 0 : i32
    %c0_i32_1 = arith.constant 0 : i32
    return %c0_i32, %c0_i32_0 : i32, i32
  }
  func.func @transform_5(%arg0: i32, %arg1: i32) -> (i32, i32) {
    %c0_i32 = arith.constant 0 : i32
    %c0_i32_0 = arith.constant 0 : i32
    %c0_i32_1 = arith.constant 0 : i32
    return %c0_i32, %c0_i32_0 : i32, i32
  }
  func.func @transform_6(%arg0: i32, %arg1: i32) -> (i32, i32) {
    %c0_i32 = arith.constant 0 : i32
    %c0_i32_0 = arith.constant 0 : i32
    %c0_i32_1 = arith.constant 0 : i32
    return %c0_i32, %c0_i32_0 : i32, i32
  }
  func.func @transform_7(%arg0: i32, %arg1: i32) -> (i32, i32) {
    %c0_i32 = arith.constant 0 : i32
    %c0_i32_0 = arith.constant 0 : i32
    %c0_i32_1 = arith.constant 0 : i32
    return %c0_i32, %c0_i32_0 : i32, i32
  }
  func.func @transform_8(%arg0: i32, %arg1: i32) -> i32 {
    %c0_i32 = arith.constant 0 : i32
    %c0_i32_0 = arith.constant 0 : i32
    return %c0_i32 : i32
  }
  func.func @transform_9(%arg0: i32, %arg1: i32) -> (i32, i32, i32) {
    %c0_i32 = arith.constant 0 : i32
    %c0_i32_0 = arith.constant 0 : i32
    return %arg0, %arg1, %c0_i32 : i32, i32, i32
  }
}

</mosaic_0001>

<llo_original>
// kernel: tpu_custom_call.1
$region0: #{tpu_custom_call.1}
  #allocation0 [shape = 'u32[]', space=smem, size = 0x4, offset = 0x4, fixed_abs, tag = 'smem constant byte address 0x4 - core index']
  #allocation1 [shape = 'u32[72,128]{1,0:T(1,128)}', space=vmem, size = 0x9000, scoped, tag = 'internal scratch']
  %s0 = inlined_call_operand.hbm [shape: f32[8,128], index: 0, kind: input, shape index: {}]
  %s1 = inlined_call_operand.hbm [shape: f32[8,128], index: 1, kind: output, shape index: {}]
  %s2 = sld [smem:[#allocation0]]
  $region41: #{tpu_custom_call.1} parent=0
    _
  %s4 = ssub.s32 1, %s2
  %s5 = scalar_select 0, %s4, %s2
  $region1: #{tpu_custom_call.1} parent=0
    #allocation2 [shape = 'u8[4096]{0}', space=vmem, size = 0x1000, scoped, tag = 'input window, operand 0, single buffered']
    #allocation3 [shape = 's32[2]{0}', space=sflag, size = 0x8, scoped, tag = 'scoped memory for tpu_custom_call.1']
    #allocation4 [shape = 's32[2]{0}', space=sflag, size = 0x8, scoped, tag = 'scoped memory for tpu_custom_call.1']
    #allocation5 [shape = 'u8[4096]{0}', space=vmem, size = 0x1000, scoped, tag = 'output window, operand 0, single buffered']
    %6 = vsyncpa [#allocation3], 0
    %7 = vsyncpa [#allocation4], 0
    loop: start=0, step=1, limit=4
    $region2: #{tpu_custom_call.1} parent=1 // loop_pre_header
      _
    $region3: #{tpu_custom_call.1} parent=1 // loop_header
      %s9 = sphi 0, %s13
      %p10 = scmp.ge.s32.totalorder %s9, 4
      %s17 = sphi 0, %s17
      %s19 = sphi 0, %s17
      %s20 = sphi 0, %s19
      %s34 = sphi 0, %s20
      %s38 = sphi 0, %s38
      %s40 = sphi 0, %s38
      %s41 = sphi 0, %s40
      %s55 = sphi 0, %s41
    $region4: #{tpu_custom_call.1} parent=1 // loop_header_branch
      %12 = sbr.rel (%p10) target = $region8
    $region5: #{tpu_custom_call.1} parent=1 // loop_body
      %s14 = ssub.s32 %s9, 1
      %s15 = ssub.s32 %s9, 2
      %s16 = sadd.s32 %s9, 1
      %s18 = sadd.s32 %s17, 1
      %p21 = scmp.eq.s32.totalorder %s9, 1
      %p22 = scmp.ne.s32.totalorder %s17, %s19
      %p23 = scmp.eq.s32.totalorder %s9, 0
      %p24 = por %p22, %p23
      %p25 = scmp.ne.s32.totalorder %s17, %s19
      %p26 = scmp.eq.s32.totalorder %s14, 1
      %p27 = por %p25, %p26
      %p28 = scmp.ne.s32.totalorder %s19, %s20
      %p29 = scmp.eq.s32.totalorder %s14, 0
      %p30 = por %p28, %p29
      %p31 = scmp.ne.s32.totalorder %s19, %s20
      %p32 = scmp.eq.s32.totalorder %s15, 1
      %p33 = por %p31, %p32
      %p35 = scmp.ne.s32.totalorder %s20, %s34
      %p36 = scmp.eq.s32.totalorder %s15, 0
      %p37 = por %p35, %p36
      %s39 = sadd.s32 %s38, 1
      %p42 = scmp.eq.s32.totalorder %s9, 1
      %p43 = scmp.ne.s32.totalorder %s38, %s40
      %p44 = scmp.eq.s32.totalorder %s9, 0
      %p45 = por %p43, %p44
      %p46 = scmp.ne.s32.totalorder %s38, %s40
      %p47 = scmp.eq.s32.totalorder %s14, 1
      %p48 = por %p46, %p47
      %p49 = scmp.ne.s32.totalorder %s40, %s41
      %p50 = scmp.eq.s32.totalorder %s14, 0
      %p51 = por %p49, %p50
      %p52 = scmp.ne.s32.totalorder %s40, %s41
      %p53 = scmp.eq.s32.totalorder %s15, 1
      %p54 = por %p52, %p53
      %p56 = scmp.ne.s32.totalorder %s41, %s55
      %p57 = scmp.eq.s32.totalorder %s15, 0
      %p58 = por %p56, %p57
      %p59 = scmp.le.s32.totalorder 1, %s9
      %p60 = scmp.lt.s32.totalorder %s9, 3
      %p61 = pnand %p59, %p60
      %p62 = pneg %p61
      // Predicated region
      $region9: #{tpu_custom_call.1} parent=5 // pred_check
        _
      $region10: #{tpu_custom_call.1} parent=5 // pred_check_branch
        %64 = sbr.rel (%p61) target = $region12
      $region11: #{tpu_custom_call.1} parent=5 // pred_region
        %s65 = ssub.s32 %s9, 1
        // Predicated region
        $region13: #{tpu_custom_call.1} parent=11 // pred_check
          %p66 = pneg %p30
        $region14: #{tpu_custom_call.1} parent=11 // pred_check_branch
          %68 = sbr.rel (%p66) target = $region16
        $region15: #{tpu_custom_call.1} parent=11 // pred_region
          %70 = vsyncadd [#allocation3], 0
          %s72 = sshll.u32 %s0, 4
          %s73 = int_to_ptr.hbm [resolvable:$true] %s72
          %s74 = sshll.u32 [#allocation2], 4
          %s75 = int_to_ptr.vmem [resolvable:$true] %s74
          %77 = dma.hbm_to_vmem [thread:$0]  %s73, 128, %s75, [#allocation3]
        $region16: #{tpu_custom_call.1} parent=11 // pred_fallthru
          _
      $region12: #{tpu_custom_call.1} parent=5 // pred_fallthru
        _
      %p78 = scmp.lt.s32.totalorder %s9, 2
      // Predicated region
      $region17: #{tpu_custom_call.1} parent=5 // pred_check
        %p79 = pneg %p78
      $region18: #{tpu_custom_call.1} parent=5 // pred_check_branch
        %81 = sbr.rel (%p79) target = $region20
      $region19: #{tpu_custom_call.1} parent=5 // pred_region
        _
      $region20: #{tpu_custom_call.1} parent=5 // pred_fallthru
        _
      %p82 = scmp.le.s32.totalorder 1, %s9
      %p83 = scmp.lt.s32.totalorder %s9, 3
      %p84 = pnand %p82, %p83
      %p85 = pneg %p84
      // Predicated region
      $region21: #{tpu_custom_call.1} parent=5 // pred_check
        _
      $region22: #{tpu_custom_call.1} parent=5 // pred_check_branch
        %87 = sbr.rel (%p84) target = $region24
      $region23: #{tpu_custom_call.1} parent=5 // pred_region
        %s88 = ssub.s32 %s9, 1
        // Predicated region
        $region25: #{tpu_custom_call.1} parent=23 // pred_check
          %p89 = pneg %p30
        $region26: #{tpu_custom_call.1} parent=23 // pred_check_branch
          %91 = sbr.rel (%p89) target = $region28
        $region27: #{tpu_custom_call.1} parent=23 // pred_region
          %93 = dma.done [#allocation3], 128
        $region28: #{tpu_custom_call.1} parent=23 // pred_fallthru
          _
        %p94 = pneg %p30
        %p95 = pneg %p27
        %p96 = pneg %p51
        %p97 = pneg %p48
        %v98 = vld [vmem:[#allocation2] sm:$0xff]
        %v99 = vmul.f32 %v98, 2.0
        %100 = vst [vmem:[#allocation5] sm:$0xff] %v99
        // Predicated region
        $region29: #{tpu_custom_call.1} parent=23 // pred_check
          %p101 = pneg %p48
        $region30: #{tpu_custom_call.1} parent=23 // pred_check_branch
          %103 = sbr.rel (%p101) target = $region32
        $region31: #{tpu_custom_call.1} parent=23 // pred_region
          %105 = vsyncadd [#allocation4], 0
          %s107 = sshll.u32 [#allocation5], 4
          %s108 = int_to_ptr.vmem [resolvable:$true] %s107
          %s109 = sshll.u32 %s1, 4
          %s110 = int_to_ptr.hbm [resolvable:$true] %s109
          %112 = dma.vmem_to_hbm [thread:$0]  %s108, 128, %s110, [#allocation4]
        $region32: #{tpu_custom_call.1} parent=23 // pred_fallthru
          _
        // Predicated region
        $region33: #{tpu_custom_call.1} parent=23 // pred_check
          %p113 = pneg %p48
        $region34: #{tpu_custom_call.1} parent=23 // pred_check_branch
          %115 = sbr.rel (%p113) target = $region36
        $region35: #{tpu_custom_call.1} parent=23 // pred_region
          %117 = dma.done [#allocation4], 128
        $region36: #{tpu_custom_call.1} parent=23 // pred_fallthru
          _
      $region24: #{tpu_custom_call.1} parent=5 // pred_fallthru
        _
      %p118 = scmp.le.s32.totalorder 2, %s9
      // Predicated region
      $region37: #{tpu_custom_call.1} parent=5 // pred_check
        %p119 = pneg %p118
      $region38: #{tpu_custom_call.1} parent=5 // pred_check_branch
        %121 = sbr.rel (%p119) target = $region40
      $region39: #{tpu_custom_call.1} parent=5 // pred_region
        %s122 = ssub.s32 %s9, 2
      $region40: #{tpu_custom_call.1} parent=5 // pred_fallthru
        _
    $region6: #{tpu_custom_call.1} parent=1 // loop_footer
      %s13 = sadd.s32 1, %s9
    $region7: #{tpu_custom_call.1} parent=1 // loop_footer_branch
      %8 = sbr.rel target = $region3
    $region8: #{tpu_custom_call.1} parent=1 // loop_exit
      _
    %123 = vsyncpa [#allocation3], 1
    %s124 = scalar_lea.sflag [#allocation3], 1
    %125 = vsyncpa %s124, 1
    %126 = vsyncpa [#allocation4], 1
    %s127 = scalar_lea.sflag [#allocation4], 1
    %128 = vsyncpa %s127, 1

// kernel: _lambda_.4
$region0: #{_lambda_.4}
  #allocation0 [shape = 'u32[]', space=smem, size = 0x4, offset = 0x4, fixed_abs, tag = 'smem constant byte address 0x4 - core index']
  #allocation1 [shape = 'u32[72,128]{1,0:T(1,128)}', space=vmem, size = 0x9000, scoped, tag = 'internal scratch']
  %s0 = inlined_call_operand.vmem [shape: bf16[2,32,256], index: 0, kind: input, shape index: {}, may-alias: {0,1}]
  %s1 = inlined_call_operand.vmem [shape: bf16[2,32,256], index: 1, kind: input, shape index: {}, may-alias: {0,1}]
  %s2 = inlined_call_operand.vmem [shape: bf16[2,256,128], index: 2, kind: input, shape index: {}]
  %s3 = inlined_call_operand.vmem [shape: f32[1,128], index: 3, kind: input, shape index: {}]
  %s4 = inlined_call_operand.vmem [shape: bf16[128,128], index: 4, kind: input, shape index: {}]
  %s5 = inlined_call_operand.vmem [shape: f32[1,128], index: 5, kind: input, shape index: {}]
  %s6 = inlined_call_operand.vmem [shape: f32[1,128], index: 6, kind: input, shape index: {}]
  %s7 = inlined_call_operand.vmem [shape: f32[1,128], index: 7, kind: input, shape index: {}]
  %s8 = inlined_call_operand.vmem [shape: f32[2], index: 8, kind: input, shape index: {}]
  %s9 = inlined_call_operand.vmem [shape: bf16[2,16,128], index: 9, kind: output, shape index: {}]
  %s10 = sld [smem:[#allocation0]]
  $region73: #{_lambda_.4} parent=0
    _
  %s12 = ssub.s32 1, %s10
  %s13 = scalar_select 0, %s12, %s10
  $region1: #{_lambda_.4} parent=0
    #allocation2 [shape = 'u8[512]{0}', space=smem, size = 0x200, scoped, tag = 'input window, operand 8, single buffered']
    #allocation3 [shape = 's32[2]{0}', space=sflag, size = 0x8, scoped, tag = 'scoped memory for _lambda_.4']
    %14 = vsyncpa [#allocation3], 0
    loop: start=0, step=1, limit=4
    $region2: #{_lambda_.4} parent=1 // loop_pre_header
      _
    $region3: #{_lambda_.4} parent=1 // loop_header
      %s16 = sphi 0, %s20
      %p17 = scmp.ge.s32.totalorder %s16, 4
      %s23 = sphi 0, %s35
      %s24 = sphi 0, %s31
      %s25 = sphi 0, %s23
      %s26 = sphi 0, %s24
      %s27 = sphi 0, %s25
      %s28 = sphi 0, %s26
      %s40 = sphi 0, %s42
      %s43 = sphi 0, %s40
      %s44 = sphi 0, %s43
      %s60 = sphi 0, %s44
      %s70 = sphi 0, %s72
      %s73 = sphi 0, %s70
      %s74 = sphi 0, %s73
      %s90 = sphi 0, %s74
      %s94 = sphi 0, %s94
      %s96 = sphi 0, %s94
      %s97 = sphi 0, %s96
      %s111 = sphi 0, %s97
      %s115 = sphi 0, %s115
      %s117 = sphi 0, %s115
      %s118 = sphi 0, %s117
      %s132 = sphi 0, %s118
      %s136 = sphi 0, %s136
      %s138 = sphi 0, %s136
      %s139 = sphi 0, %s138
      %s153 = sphi 0, %s139
      %s157 = sphi 0, %s157
      %s159 = sphi 0, %s157
      %s160 = sphi 0, %s159
      %s174 = sphi 0, %s160
      %s178 = sphi 0, %s178
      %s180 = sphi 0, %s178
      %s181 = sphi 0, %s180
      %s195 = sphi 0, %s181
      %s199 = sphi 0, %s199
      %s201 = sphi 0, %s199
      %s202 = sphi 0, %s201
      %s216 = sphi 0, %s202
      %s220 = sphi 0, %s220
      %s222 = sphi 0, %s220
      %s223 = sphi 0, %s222
      %s237 = sphi 0, %s223
      %s245 = sphi 0, %s247
      %s248 = sphi 0, %s245
      %s249 = sphi 0, %s248
      %s265 = sphi 0, %s249
    $region4: #{_lambda_.4} parent=1 // loop_header_branch
      %19 = sbr.rel (%p17) target = $region8
    $region5: #{_lambda_.4} parent=1 // loop_body
      %s21 = ssub.s32 %s16, 1
      %s22 = ssub.s32 %s16, 2
      %s29 = sadd.s32 1, %s24
      %p30 = scmp.ge.s32.totalorder %s29, 1
      %s31 = scalar_select %p30, 0, %s29
      %s32 = sadd.s32 1, %s23
      %s33 = scalar_select %p30, %s32, %s23
      %p34 = scmp.ge.s32.totalorder %s33, 2
      %s35 = scalar_select %p34, 0, %s33
      %s36 = ssub.s32 %s23, %s35
      %s37 = ssub.s32 %s24, %s31
      %s38 = sor.u32 %s36, %s37
      %p39 = scmp.eq.s32.totalorder %s38, 0
      %s41 = sadd.s32 %s40, 1
      %s42 = scalar_select %p39, %s40, %s41
      %p45 = pneg %p39
      %p46 = scmp.eq.s32.totalorder %s16, 1
      %p47 = por %p45, %p46
      %p48 = scmp.ne.s32.totalorder %s40, %s43
      %p49 = scmp.eq.s32.totalorder %s16, 0
      %p50 = por %p48, %p49
      %p51 = scmp.ne.s32.totalorder %s40, %s43
      %p52 = scmp.eq.s32.totalorder %s21, 1
      %p53 = por %p51, %p52
      %p54 = scmp.ne.s32.totalorder %s43, %s44
      %p55 = scmp.eq.s32.totalorder %s21, 0
      %p56 = por %p54, %p55
      %p57 = scmp.ne.s32.totalorder %s43, %s44
      %p58 = scmp.eq.s32.totalorder %s22, 1
      %p59 = por %p57, %p58
      %p61 = scmp.ne.s32.totalorder %s44, %s60
      %p62 = scmp.eq.s32.totalorder %s22, 0
      %p63 = por %p61, %p62
      %s64 = sadd.s32 %s24, 1
      %s65 = sadd.s32 %s31, 1
      %s66 = ssub.s32 %s23, %s35
      %s67 = ssub.s32 %s64, %s65
      %s68 = sor.u32 %s66, %s67
      %p69 = scmp.eq.s32.totalorder %s68, 0
      %s71 = sadd.s32 %s70, 1
      %s72 = scalar_select %p69, %s70, %s71
      %p75 = pneg %p69
      %p76 = scmp.eq.s32.totalorder %s16, 1
      %p77 = por %p75, %p76
      %p78 = scmp.ne.s32.totalorder %s70, %s73
      %p79 = scmp.eq.s32.totalorder %s16, 0
      %p80 = por %p78, %p79
      %p81 = scmp.ne.s32.totalorder %s70, %s73
      %p82 = scmp.eq.s32.totalorder %s21, 1
      %p83 = por %p81, %p82
      %p84 = scmp.ne.s32.totalorder %s73, %s74
      %p85 = scmp.eq.s32.totalorder %s21, 0
      %p86 = por %p84, %p85
      %p87 = scmp.ne.s32.totalorder %s73, %s74
      %p88 = scmp.eq.s32.totalorder %s22, 1
      %p89 = por %p87, %p88
      %p91 = scmp.ne.s32.totalorder %s74, %s90
      %p92 = scmp.eq.s32.totalorder %s22, 0
      %p93 = por %p91, %p92
      %s95 = sadd.s32 %s94, 1
      %p98 = scmp.eq.s32.totalorder %s16, 1
      %p99 = scmp.ne.s32.totalorder %s94, %s96
      %p100 = scmp.eq.s32.totalorder %s16, 0
      %p101 = por %p99, %p100
      %p102 = scmp.ne.s32.totalorder %s94, %s96
      %p103 = scmp.eq.s32.totalorder %s21, 1
      %p104 = por %p102, %p103
      %p105 = scmp.ne.s32.totalorder %s96, %s97
      %p106 = scmp.eq.s32.totalorder %s21, 0
      %p107 = por %p105, %p106
      %p108 = scmp.ne.s32.totalorder %s96, %s97
      %p109 = scmp.eq.s32.totalorder %s22, 1
      %p110 = por %p108, %p109
      %p112 = scmp.ne.s32.totalorder %s97, %s111
      %p113 = scmp.eq.s32.totalorder %s22, 0
      %p114 = por %p112, %p113
      %s116 = sadd.s32 %s115, 1
      %p119 = scmp.eq.s32.totalorder %s16, 1
      %p120 = scmp.ne.s32.totalorder %s115, %s117
      %p121 = scmp.eq.s32.totalorder %s16, 0
      %p122 = por %p120, %p121
      %p123 = scmp.ne.s32.totalorder %s115, %s117
      %p124 = scmp.eq.s32.totalorder %s21, 1
      %p125 = por %p123, %p124
      %p126 = scmp.ne.s32.totalorder %s117, %s118
      %p127 = scmp.eq.s32.totalorder %s21, 0
      %p128 = por %p126, %p127
      %p129 = scmp.ne.s32.totalorder %s117, %s118
      %p130 = scmp.eq.s32.totalorder %s22, 1
      %p131 = por %p129, %p130
      %p133 = scmp.ne.s32.totalorder %s118, %s132
      %p134 = scmp.eq.s32.totalorder %s22, 0
      %p135 = por %p133, %p134
      %s137 = sadd.s32 %s136, 1
      %p140 = scmp.eq.s32.totalorder %s16, 1
      %p141 = scmp.ne.s32.totalorder %s136, %s138
      %p142 = scmp.eq.s32.totalorder %s16, 0
      %p143 = por %p141, %p142
      %p144 = scmp.ne.s32.totalorder %s136, %s138
      %p145 = scmp.eq.s32.totalorder %s21, 1
      %p146 = por %p144, %p145
      %p147 = scmp.ne.s32.totalorder %s138, %s139
      %p148 = scmp.eq.s32.totalorder %s21, 0
      %p149 = por %p147, %p148
      %p150 = scmp.ne.s32.totalorder %s138, %s139
      %p151 = scmp.eq.s32.totalorder %s22, 1
      %p152 = por %p150, %p151
      %p154 = scmp.ne.s32.totalorder %s139, %s153
      %p155 = scmp.eq.s32.totalorder %s22, 0
      %p156 = por %p154, %p155
      %s158 = sadd.s32 %s157, 1
      %p161 = scmp.eq.s32.totalorder %s16, 1
      %p162 = scmp.ne.s32.totalorder %s157, %s159
      %p163 = scmp.eq.s32.totalorder %s16, 0
      %p164 = por %p162, %p163
      %p165 = scmp.ne.s32.totalorder %s157, %s159
      %p166 = scmp.eq.s32.totalorder %s21, 1
      %p167 = por %p165, %p166
      %p168 = scmp.ne.s32.totalorder %s159, %s160
      %p169 = scmp.eq.s32.totalorder %s21, 0
      %p170 = por %p168, %p169
      %p171 = scmp.ne.s32.totalorder %s159, %s160
      %p172 = scmp.eq.s32.totalorder %s22, 1
      %p173 = por %p171, %p172
      %p175 = scmp.ne.s32.totalorder %s160, %s174
      %p176 = scmp.eq.s32.totalorder %s22, 0
      %p177 = por %p175, %p176
      %s179 = sadd.s32 %s178, 1
      %p182 = scmp.eq.s32.totalorder %s16, 1
      %p183 = scmp.ne.s32.totalorder %s178, %s180
      %p184 = scmp.eq.s32.totalorder %s16, 0
      %p185 = por %p183, %p184
      %p186 = scmp.ne.s32.totalorder %s178, %s180
      %p187 = scmp.eq.s32.totalorder %s21, 1
      %p188 = por %p186, %p187
      %p189 = scmp.ne.s32.totalorder %s180, %s181
      %p190 = scmp.eq.s32.totalorder %s21, 0
      %p191 = por %p189, %p190
      %p192 = scmp.ne.s32.totalorder %s180, %s181
      %p193 = scmp.eq.s32.totalorder %s22, 1
      %p194 = por %p192, %p193
      %p196 = scmp.ne.s32.totalorder %s181, %s195
      %p197 = scmp.eq.s32.totalorder %s22, 0
      %p198 = por %p196, %p197
      %s200 = sadd.s32 %s199, 1
      %p203 = scmp.eq.s32.totalorder %s16, 1
      %p204 = scmp.ne.s32.totalorder %s199, %s201
      %p205 = scmp.eq.s32.totalorder %s16, 0
      %p206 = por %p204, %p205
      %p207 = scmp.ne.s32.totalorder %s199, %s201
      %p208 = scmp.eq.s32.totalorder %s21, 1
      %p209 = por %p207, %p208
      %p210 = scmp.ne.s32.totalorder %s201, %s202
      %p211 = scmp.eq.s32.totalorder %s21, 0
      %p212 = por %p210, %p211
      %p213 = scmp.ne.s32.totalorder %s201, %s202
      %p214 = scmp.eq.s32.totalorder %s22, 1
      %p215 = por %p213, %p214
      %p217 = scmp.ne.s32.totalorder %s202, %s216
      %p218 = scmp.eq.s32.totalorder %s22, 0
      %p219 = por %p217, %p218
      %s221 = sadd.s32 %s220, 1
      %p224 = scmp.eq.s32.totalorder %s16, 1
      %p225 = scmp.ne.s32.totalorder %s220, %s222
      %p226 = scmp.eq.s32.totalorder %s16, 0
      %p227 = por %p225, %p226
      %p228 = scmp.ne.s32.totalorder %s220, %s222
      %p229 = scmp.eq.s32.totalorder %s21, 1
      %p230 = por %p228, %p229
      %p231 = scmp.ne.s32.totalorder %s222, %s223
      %p232 = scmp.eq.s32.totalorder %s21, 0
      %p233 = por %p231, %p232
      %p234 = scmp.ne.s32.totalorder %s222, %s223
      %p235 = scmp.eq.s32.totalorder %s22, 1
      %p236 = por %p234, %p235
      %p238 = scmp.ne.s32.totalorder %s223, %s237
      %p239 = scmp.eq.s32.totalorder %s22, 0
      %p240 = por %p238, %p239
      %s241 = ssub.s32 %s23, %s35
      %s242 = ssub.s32 %s24, %s31
      %s243 = sor.u32 %s241, %s242
      %p244 = scmp.eq.s32.totalorder %s243, 0
      %s246 = sadd.s32 %s245, 1
      %s247 = scalar_select %p244, %s245, %s246
      %p250 = pneg %p244
      %p251 = scmp.eq.s32.totalorder %s16, 1
      %p252 = por %p250, %p251
      %p253 = scmp.ne.s32.totalorder %s245, %s248
      %p254 = scmp.eq.s32.totalorder %s16, 0
      %p255 = por %p253, %p254
      %p256 = scmp.ne.s32.totalorder %s245, %s248
      %p257 = scmp.eq.s32.totalorder %s21, 1
      %p258 = por %p256, %p257
      %p259 = scmp.ne.s32.totalorder %s248, %s249
      %p260 = scmp.eq.s32.totalorder %s21, 0
      %p261 = por %p259, %p260
      %p262 = scmp.ne.s32.totalorder %s248, %s249
      %p263 = scmp.eq.s32.totalorder %s22, 1
      %p264 = por %p262, %p263
      %p266 = scmp.ne.s32.totalorder %s249, %s265
      %p267 = scmp.eq.s32.totalorder %s22, 0
      %p268 = por %p266, %p267
      %p269 = scmp.le.s32.totalorder 1, %s16
      %p270 = scmp.lt.s32.totalorder %s16, 3
      %p271 = pnand %p269, %p270
      %p272 = pneg %p271
      // Predicated region
      $region9: #{_lambda_.4} parent=5 // pred_check
        _
      $region10: #{_lambda_.4} parent=5 // pred_check_branch
        %274 = sbr.rel (%p271) target = $region12
      $region11: #{_lambda_.4} parent=5 // pred_region
        %s275 = ssub.s32 %s16, 1
        // Predicated region
        $region13: #{_lambda_.4} parent=11 // pred_check
          %p276 = pneg %p107
        $region14: #{_lambda_.4} parent=11 // pred_check_branch
          %278 = sbr.rel (%p276) target = $region16
        $region15: #{_lambda_.4} parent=11 // pred_region
          _
        $region16: #{_lambda_.4} parent=11 // pred_fallthru
          _
        // Predicated region
        $region17: #{_lambda_.4} parent=11 // pred_check
          %p279 = pneg %p128
        $region18: #{_lambda_.4} parent=11 // pred_check_branch
          %281 = sbr.rel (%p279) target = $region20
        $region19: #{_lambda_.4} parent=11 // pred_region
          _
        $region20: #{_lambda_.4} parent=11 // pred_fallthru
          _
        // Predicated region
        $region21: #{_lambda_.4} parent=11 // pred_check
          %p282 = pneg %p149
        $region22: #{_lambda_.4} parent=11 // pred_check_branch
          %284 = sbr.rel (%p282) target = $region24
        $region23: #{_lambda_.4} parent=11 // pred_region
          _
        $region24: #{_lambda_.4} parent=11 // pred_fallthru
          _
        // Predicated region
        $region25: #{_lambda_.4} parent=11 // pred_check
          %p285 = pneg %p170
        $region26: #{_lambda_.4} parent=11 // pred_check_branch
          %287 = sbr.rel (%p285) target = $region28
        $region27: #{_lambda_.4} parent=11 // pred_region
          _
        $region28: #{_lambda_.4} parent=11 // pred_fallthru
          _
        // Predicated region
        $region29: #{_lambda_.4} parent=11 // pred_check
          %p288 = pneg %p191
        $region30: #{_lambda_.4} parent=11 // pred_check_branch
          %290 = sbr.rel (%p288) target = $region32
        $region31: #{_lambda_.4} parent=11 // pred_region
          _
        $region32: #{_lambda_.4} parent=11 // pred_fallthru
          _
        // Predicated region
        $region33: #{_lambda_.4} parent=11 // pred_check
          %p291 = pneg %p212
        $region34: #{_lambda_.4} parent=11 // pred_check_branch
          %293 = sbr.rel (%p291) target = $region36
        $region35: #{_lambda_.4} parent=11 // pred_region
          _
        $region36: #{_lambda_.4} parent=11 // pred_fallthru
          _
        // Predicated region
        $region37: #{_lambda_.4} parent=11 // pred_check
          %p294 = pneg %p233
        $region38: #{_lambda_.4} parent=11 // pred_check_branch
          %296 = sbr.rel (%p294) target = $region40
        $region39: #{_lambda_.4} parent=11 // pred_region
          %298 = vsyncadd [#allocation3], 0
          %s300 = sshll.u32 %s8, 4
          %s301 = int_to_ptr.vmem [resolvable:$true] %s300
          %303 = dma.vmem_to_smem %s301, 16, [#allocation2], [#allocation3]
        $region40: #{_lambda_.4} parent=11 // pred_fallthru
          _
      $region12: #{_lambda_.4} parent=5 // pred_fallthru
        _
      %p304 = scmp.lt.s32.totalorder %s16, 2
      // Predicated region
      $region41: #{_lambda_.4} parent=5 // pred_check
        %p305 = pneg %p304
      $region42: #{_lambda_.4} parent=5 // pred_check_branch
        %307 = sbr.rel (%p305) target = $region44
      $region43: #{_lambda_.4} parent=5 // pred_region
        // Predicated region
        $region45: #{_lambda_.4} parent=43 // pred_check
          %p308 = pneg %p50
        $region46: #{_lambda_.4} parent=43 // pred_check_branch
          %310 = sbr.rel (%p308) target = $region48
        $region47: #{_lambda_.4} parent=43 // pred_region
          %s311 = smul.u32 2, %s24
          %p312 = scmp.lt.s32.totalorder %s23, 1
          %s313 = scalar_select %p312, %s23, 1
          %p314 = scmp.lt.s32.totalorder %s311, 3
          %s315 = scalar_select %p314, %s311, 3
          %s316 = smul.addr %s315, 2
          %s317 = smul.addr %s313, 8
          %s318 = sadd.s32 %s316, %s317
          %s319 = smul.addr %s318, 4
          %s320 = scalar_lea.vmem %s0, %s319
          %s321 = smul.u32 2, %s24
        $region48: #{_lambda_.4} parent=43 // pred_fallthru
          _
        // Predicated region
        $region49: #{_lambda_.4} parent=43 // pred_check
          %p322 = pneg %p80
        $region50: #{_lambda_.4} parent=43 // pred_check_branch
          %324 = sbr.rel (%p322) target = $region52
        $region51: #{_lambda_.4} parent=43 // pred_region
          %s325 = sadd.s32 %s24, 1
          %s326 = smul.u32 2, %s325
          %p327 = scmp.lt.s32.totalorder %s23, 1
          %s328 = scalar_select %p327, %s23, 1
          %p329 = scmp.lt.s32.totalorder %s326, 3
          %s330 = scalar_select %p329, %s326, 3
          %s331 = smul.addr %s330, 2
          %s332 = smul.addr %s328, 8
          %s333 = sadd.s32 %s331, %s332
          %s334 = smul.addr %s333, 4
          %s335 = scalar_lea.vmem %s1, %s334
          %s336 = sadd.s32 %s24, 1
          %s337 = smul.u32 2, %s336
        $region52: #{_lambda_.4} parent=43 // pred_fallthru
          _
      $region44: #{_lambda_.4} parent=5 // pred_fallthru
        _
      %p338 = scmp.le.s32.totalorder 1, %s16
      %p339 = scmp.lt.s32.totalorder %s16, 3
      %p340 = pnand %p338, %p339
      %p341 = pneg %p340
      // Predicated region
      $region53: #{_lambda_.4} parent=5 // pred_check
        _
      $region54: #{_lambda_.4} parent=5 // pred_check_branch
        %343 = sbr.rel (%p340) target = $region56
      $region55: #{_lambda_.4} parent=5 // pred_region
        %s344 = ssub.s32 %s16, 1
        // Predicated region
        $region57: #{_lambda_.4} parent=55 // pred_check
          %p345 = pneg %p233
        $region58: #{_lambda_.4} parent=55 // pred_check_branch
          %347 = sbr.rel (%p345) target = $region60
        $region59: #{_lambda_.4} parent=55 // pred_region
          %349 = dma.done [#allocation3], 16
        $region60: #{_lambda_.4} parent=55 // pred_fallthru
          _
        %350 = sfence
        %s351 = smul.u32 2, %s26
        %p352 = scmp.lt.s32.totalorder %s25, 1
        %s353 = scalar_select %p352, %s25, 1
        %p354 = scmp.lt.s32.totalorder %s351, 3
        %s355 = scalar_select %p354, %s351, 3
        %s356 = smul.addr %s355, 2
        %s357 = smul.addr %s353, 8
        %s358 = sadd.s32 %s356, %s357
        %s359 = smul.addr %s358, 4
        %s360 = scalar_lea.vmem %s0, %s359
        %p361 = pneg %p56
        %p362 = pneg %p53
        %s363 = sadd.s32 %s26, 1
        %s364 = smul.u32 2, %s363
        %p365 = scmp.lt.s32.totalorder %s25, 1
        %s366 = scalar_select %p365, %s25, 1
        %p367 = scmp.lt.s32.totalorder %s364, 3
        %s368 = scalar_select %p367, %s364, 3
        %s369 = smul.addr %s368, 2
        %s370 = smul.addr %s366, 8
        %s371 = sadd.s32 %s369, %s370
        %s372 = smul.addr %s371, 4
        %s373 = scalar_lea.vmem %s1, %s372
        %p374 = pneg %p86
        %p375 = pneg %p83
        %p376 = pneg %p107
        %p377 = pneg %p104
        %p378 = pneg %p128
        %p379 = pneg %p125
        %p380 = pneg %p149
        %p381 = pneg %p146
        %p382 = pneg %p170
        %p383 = pneg %p167
        %p384 = pneg %p191
        %p385 = pneg %p188
        %p386 = pneg %p212
        %p387 = pneg %p209
        %p388 = pneg %p233
        %p389 = pneg %p230
        %p390 = pneg %p261
        %p391 = pneg %p258
        %s392 = smul.u32 2, %s26
        %p393 = scmp.lt.s32.totalorder %s25, 1
        %s394 = scalar_select %p393, %s25, 1
        %p395 = scmp.lt.s32.totalorder %s392, 1
        %s396 = scalar_select %p395, %s392, 1
        %s397 = smul.addr %s394, 2
        %s398 = sadd.s32 %s396, %s397
        %s399 = smul.addr %s398, 4
        %s400 = scalar_lea.vmem %s9, %s399
        %s401 = smul.u32 2, %s26
        %p402 = scmp.lt.s32.totalorder %s25, 1
        %s403 = scalar_select %p402, %s25, 1
        %p404 = scmp.lt.s32.totalorder %s401, 3
        %s405 = scalar_select %p404, %s401, 3
        %s406 = smul.addr %s405, 2
        %s407 = smul.addr %s403, 8
        %s408 = sadd.s32 %s406, %s407
        %s409 = smul.addr %s408, 4
        %s410 = scalar_lea.vmem %s0, %s409
        %s411 = smul.u32 2, %s26
        %s412 = sadd.s32 %s26, 1
        %s413 = smul.u32 2, %s412
        %p414 = scmp.lt.s32.totalorder %s25, 1
        %s415 = scalar_select %p414, %s25, 1
        %p416 = scmp.lt.s32.totalorder %s413, 3
        %s417 = scalar_select %p416, %s413, 3
        %s418 = smul.addr %s417, 2
        %s419 = smul.addr %s415, 8
        %s420 = sadd.s32 %s418, %s419
        %s421 = smul.addr %s420, 4
        %s422 = scalar_lea.vmem %s1, %s421
        %s423 = sadd.s32 %s26, 1
        %s424 = smul.u32 2, %s423
        %s425 = smul.u32 2, %s26
        %p426 = scmp.lt.s32.totalorder %s25, 1
        %s427 = scalar_select %p426, %s25, 1
        %p428 = scmp.lt.s32.totalorder %s425, 1
        %s429 = scalar_select %p428, %s425, 1
        %s430 = smul.addr %s427, 2
        %s431 = sadd.s32 %s429, %s430
        %s432 = smul.addr %s431, 4
        %s433 = scalar_lea.vmem %s9, %s432
        %s434 = smul.u32 2, %s26
        %v435 = vld [vmem:[%s410] sm:$0xff]
        %v436 = vld [vmem:[%s410 + $0x8] sm:$0xff]
        %v437 = vld [vmem:[%s2] sm:$0xf]
        %v438 = vld [vmem:[%s2 + $0x4] sm:$0xf]
        %v439 = vld [vmem:[%s2 + $0x8] sm:$0xf]
        %v440 = vld [vmem:[%s2 + $0xc] sm:$0xf]
        %v441 = vld [vmem:[%s2 + $0x10] sm:$0xf]
        %v442 = vld [vmem:[%s2 + $0x14] sm:$0xf]
        %v443 = vld [vmem:[%s2 + $0x18] sm:$0xf]
        %v444 = vld [vmem:[%s2 + $0x1c] sm:$0xf]
        %v445 = vld [vmem:[%s2 + $0x20] sm:$0xf]
        %v446 = vld [vmem:[%s2 + $0x24] sm:$0xf]
        %v447 = vld [vmem:[%s2 + $0x28] sm:$0xf]
        %v448 = vld [vmem:[%s2 + $0x2c] sm:$0xf]
        %v449 = vld [vmem:[%s2 + $0x30] sm:$0xf]
        %v450 = vld [vmem:[%s2 + $0x34] sm:$0xf]
        %v451 = vld [vmem:[%s2 + $0x38] sm:$0xf]
        %v452 = vld [vmem:[%s2 + $0x3c] sm:$0xf]
        %v453 = vld [vmem:[%s2 + $0x40] sm:$0xf]
        %v454 = vld [vmem:[%s2 + $0x44] sm:$0xf]
        %v455 = vld [vmem:[%s2 + $0x48] sm:$0xf]
        %v456 = vld [vmem:[%s2 + $0x4c] sm:$0xf]
        %v457 = vld [vmem:[%s2 + $0x50] sm:$0xf]
        %v458 = vld [vmem:[%s2 + $0x54] sm:$0xf]
        %v459 = vld [vmem:[%s2 + $0x58] sm:$0xf]
        %v460 = vld [vmem:[%s2 + $0x5c] sm:$0xf]
        %v461 = vld [vmem:[%s2 + $0x60] sm:$0xf]
        %v462 = vld [vmem:[%s2 + $0x64] sm:$0xf]
        %v463 = vld [vmem:[%s2 + $0x68] sm:$0xf]
        %v464 = vld [vmem:[%s2 + $0x6c] sm:$0xf]
        %v465 = vld [vmem:[%s2 + $0x70] sm:$0xf]
        %v466 = vld [vmem:[%s2 + $0x74] sm:$0xf]
        %v467 = vld [vmem:[%s2 + $0x78] sm:$0xf]
        %v468 = vld [vmem:[%s2 + $0x7c] sm:$0xf]
        %v469 = vld [vmem:[%s422] sm:$0x11]
        %v472 = vunpack.c.l.b16 %v435
        %v473 = vunpack.c.h.b16 %v435
        %v474 = vunpack.c.l.b16 %v436
        %v475 = vunpack.c.h.b16 %v436
        %v476 = vpack.c.b16 %v474, %v472
        %v477 = vpack.c.b16 %v475, %v473
        %v479 = vshrl.u32 %v476, 16
        %v481 = vshll.u32 %v476, 16
        %v483 = vrot.slane %v481, 1
        %v484 = vor.u32 %v479, %v483
        %v486 = vshrl.u32 %v477, 16
        %v488 = vshll.u32 %v477, 16
        %v490 = vrot.slane %v488, 1
        %v491 = vor.u32 %v486, %v490
        %v495 = vunpack.c.l.b16 %v469
        %v496 = vunpack.c.h.b16 %v469
        %v497 = vpack.c.b16 %v495, %v495
        %v498 = vpack.c.b16 %v496, %v496
        %v500 = vshll.u32 %v497, 16
        %v502 = vrot.slane %v500, 1
        %v504 = vshll.u32 %v498, 16
        %v506 = vrot.slane %v504, 1
        %vm509 = vcmask 1047552
        %vm510 = vsmask.f32 7424
        %vm511 = vmand %vm509, %vm510
        %v512 = vsel %vm511, %v484, %v502
        %v513 = vsel %vm511, %v491, %v506
        %s514 = scalar_lea.vmem %s2, 128
        %v515 = vld [vmem:[%s514] sm:$0xf]
        %v516 = vld [vmem:[%s514 + $0x4] sm:$0xf]
        %v517 = vld [vmem:[%s514 + $0x8] sm:$0xf]
        %v518 = vld [vmem:[%s514 + $0xc] sm:$0xf]
        %v519 = vld [vmem:[%s514 + $0x10] sm:$0xf]
        %v520 = vld [vmem:[%s514 + $0x14] sm:$0xf]
        %v521 = vld [vmem:[%s514 + $0x18] sm:$0xf]
        %v522 = vld [vmem:[%s514 + $0x1c] sm:$0xf]
        %v523 = vld [vmem:[%s514 + $0x20] sm:$0xf]
        %v524 = vld [vmem:[%s514 + $0x24] sm:$0xf]
        %v525 = vld [vmem:[%s514 + $0x28] sm:$0xf]
        %v526 = vld [vmem:[%s514 + $0x2c] sm:$0xf]
        %v527 = vld [vmem:[%s514 + $0x30] sm:$0xf]
        %v528 = vld [vmem:[%s514 + $0x34] sm:$0xf]
        %v529 = vld [vmem:[%s514 + $0x38] sm:$0xf]
        %v530 = vld [vmem:[%s514 + $0x3c] sm:$0xf]
        %v531 = vld [vmem:[%s514 + $0x40] sm:$0xf]
        %v532 = vld [vmem:[%s514 + $0x44] sm:$0xf]
        %v533 = vld [vmem:[%s514 + $0x48] sm:$0xf]
        %v534 = vld [vmem:[%s514 + $0x4c] sm:$0xf]
        %v535 = vld [vmem:[%s514 + $0x50] sm:$0xf]
        %v536 = vld [vmem:[%s514 + $0x54] sm:$0xf]
        %v537 = vld [vmem:[%s514 + $0x58] sm:$0xf]
        %v538 = vld [vmem:[%s514 + $0x5c] sm:$0xf]
        %v539 = vld [vmem:[%s514 + $0x60] sm:$0xf]
        %v540 = vld [vmem:[%s514 + $0x64] sm:$0xf]
        %v541 = vld [vmem:[%s514 + $0x68] sm:$0xf]
        %v542 = vld [vmem:[%s514 + $0x6c] sm:$0xf]
        %v543 = vld [vmem:[%s514 + $0x70] sm:$0xf]
        %v544 = vld [vmem:[%s514 + $0x74] sm:$0xf]
        %v545 = vld [vmem:[%s514 + $0x78] sm:$0xf]
        %v546 = vld [vmem:[%s514 + $0x7c] sm:$0xf]
        %v579 = vunpack.c.l.b16 %v515
        %v580 = vunpack.c.l.b16 %v516
        %v581 = vunpack.c.l.b16 %v517
        %v582 = vunpack.c.l.b16 %v518
        %v583 = vunpack.c.l.b16 %v519
        %v584 = vunpack.c.l.b16 %v520
        %v585 = vunpack.c.l.b16 %v521
        %v586 = vunpack.c.l.b16 %v522
        %v587 = vunpack.c.l.b16 %v523
        %v588 = vunpack.c.l.b16 %v524
        %v589 = vunpack.c.l.b16 %v525
        %v590 = vunpack.c.l.b16 %v526
        %v591 = vunpack.c.l.b16 %v527
        %v592 = vunpack.c.l.b16 %v528
        %v593 = vunpack.c.l.b16 %v529
        %v594 = vunpack.c.l.b16 %v530
        %v595 = vunpack.c.l.b16 %v531
        %v596 = vunpack.c.l.b16 %v532
        %v597 = vunpack.c.l.b16 %v533
        %v598 = vunpack.c.l.b16 %v534
        %v599 = vunpack.c.l.b16 %v535
        %v600 = vunpack.c.l.b16 %v536
        %v601 = vunpack.c.l.b16 %v537
        %v602 = vunpack.c.l.b16 %v538
        %v603 = vunpack.c.l.b16 %v539
        %v604 = vunpack.c.l.b16 %v540
        %v605 = vunpack.c.l.b16 %v541
        %v606 = vunpack.c.l.b16 %v542
        %v607 = vunpack.c.l.b16 %v543
        %v608 = vunpack.c.l.b16 %v544
        %v609 = vunpack.c.l.b16 %v545
        %v610 = vunpack.c.l.b16 %v546
        %v611 = vpack.c.b16 %v580, %v579
        %v612 = vpack.c.b16 %v582, %v581
        %v613 = vpack.c.b16 %v584, %v583
        %v614 = vpack.c.b16 %v586, %v585
        %v615 = vpack.c.b16 %v588, %v587
        %v616 = vpack.c.b16 %v590, %v589
        %v617 = vpack.c.b16 %v592, %v591
        %v618 = vpack.c.b16 %v594, %v593
        %v619 = vpack.c.b16 %v596, %v595
        %v620 = vpack.c.b16 %v598, %v597
        %v621 = vpack.c.b16 %v600, %v599
        %v622 = vpack.c.b16 %v602, %v601
        %v623 = vpack.c.b16 %v604, %v603
        %v624 = vpack.c.b16 %v606, %v605
        %v625 = vpack.c.b16 %v608, %v607
        %v626 = vpack.c.b16 %v610, %v609
        %643 = vmatpush.bf16.msra.mxu0 %v618
        %644 = vmatpush.bf16.msra.mxu0 %v617
        %645 = vmatpush.bf16.msra.mxu0 %v616
        %646 = vmatpush.bf16.msra.mxu0 %v615
        %647 = vmatpush.bf16.msra.mxu0 %v614
        %648 = vmatpush.bf16.msra.mxu0 %v613
        %649 = vmatpush.bf16.msra.mxu0 %v612
        %650 = vmatpush.bf16.msra.mxu0 %v611
        %651 = vmatmul.bf16.gmra.mxu0 %v512
        %v652 = vpop.f32.mrf.mxu0
        %v653 = vadd.f32 0.0, %v652
        %v654 = vpop.f32.mrf.mxu0
        %v655 = vadd.f32 0.0, %v654
        %656 = vdwg.mxu0
        %657 = vmatpush.bf16.msra.mxu0 %v626
        %658 = vmatpush.bf16.msra.mxu0 %v625
        %659 = vmatpush.bf16.msra.mxu0 %v624
        %660 = vmatpush.bf16.msra.mxu0 %v623
        %661 = vmatpush.bf16.msra.mxu0 %v622
        %662 = vmatpush.bf16.msra.mxu0 %v621
        %663 = vmatpush.bf16.msra.mxu0 %v620
        %664 = vmatpush.bf16.msra.mxu0 %v619
        %665 = vmatmul.bf16.gmra.mxu0 %v513
        %v666 = vpop.f32.mrf.mxu0
        %v667 = vadd.f32 %v653, %v666
        %v668 = vpop.f32.mrf.mxu0
        %v669 = vadd.f32 %v655, %v668
        %670 = vdwg.mxu0
        %v705 = vunpack.c.l.b16 %v437
        %v706 = vunpack.c.l.b16 %v438
        %v707 = vunpack.c.l.b16 %v439
        %v708 = vunpack.c.l.b16 %v440
        %v709 = vunpack.c.l.b16 %v441
        %v710 = vunpack.c.l.b16 %v442
        %v711 = vunpack.c.l.b16 %v443
        %v712 = vunpack.c.l.b16 %v444
        %v713 = vunpack.c.l.b16 %v445
        %v714 = vunpack.c.l.b16 %v446
        %v715 = vunpack.c.l.b16 %v447
        %v716 = vunpack.c.l.b16 %v448
        %v717 = vunpack.c.l.b16 %v449
        %v718 = vunpack.c.l.b16 %v450
        %v719 = vunpack.c.l.b16 %v451
        %v720 = vunpack.c.l.b16 %v452
        %v721 = vunpack.c.l.b16 %v453
        %v722 = vunpack.c.l.b16 %v454
        %v723 = vunpack.c.l.b16 %v455
        %v724 = vunpack.c.l.b16 %v456
        %v725 = vunpack.c.l.b16 %v457
        %v726 = vunpack.c.l.b16 %v458
        %v727 = vunpack.c.l.b16 %v459
        %v728 = vunpack.c.l.b16 %v460
        %v729 = vunpack.c.l.b16 %v461
        %v730 = vunpack.c.l.b16 %v462
        %v731 = vunpack.c.l.b16 %v463
        %v732 = vunpack.c.l.b16 %v464
        %v733 = vunpack.c.l.b16 %v465
        %v734 = vunpack.c.l.b16 %v466
        %v735 = vunpack.c.l.b16 %v467
        %v736 = vunpack.c.l.b16 %v468
        %v737 = vpack.c.b16 %v706, %v705
        %v738 = vpack.c.b16 %v708, %v707
        %v739 = vpack.c.b16 %v710, %v709
        %v740 = vpack.c.b16 %v712, %v711
        %v741 = vpack.c.b16 %v714, %v713
        %v742 = vpack.c.b16 %v716, %v715
        %v743 = vpack.c.b16 %v718, %v717
        %v744 = vpack.c.b16 %v720, %v719
        %v745 = vpack.c.b16 %v722, %v721
        %v746 = vpack.c.b16 %v724, %v723
        %v747 = vpack.c.b16 %v726, %v725
        %v748 = vpack.c.b16 %v728, %v727
        %v749 = vpack.c.b16 %v730, %v729
        %v750 = vpack.c.b16 %v732, %v731
        %v751 = vpack.c.b16 %v734, %v733
        %v752 = vpack.c.b16 %v736, %v735
        %769 = vmatpush.bf16.msra.mxu0 %v744
        %770 = vmatpush.bf16.msra.mxu0 %v743
        %771 = vmatpush.bf16.msra.mxu0 %v742
        %772 = vmatpush.bf16.msra.mxu0 %v741
        %773 = vmatpush.bf16.msra.mxu0 %v740
        %774 = vmatpush.bf16.msra.mxu0 %v739
        %775 = vmatpush.bf16.msra.mxu0 %v738
        %776 = vmatpush.bf16.msra.mxu0 %v737
        %777 = vmatmul.bf16.gmra.mxu0 %v476
        %v778 = vpop.f32.mrf.mxu0
        %v779 = vadd.f32 %v667, %v778
        %v780 = vpop.f32.mrf.mxu0
        %v781 = vadd.f32 %v669, %v780
        %782 = vdwg.mxu0
        %783 = vmatpush.bf16.msra.mxu0 %v752
        %784 = vmatpush.bf16.msra.mxu0 %v751
        %785 = vmatpush.bf16.msra.mxu0 %v750
        %786 = vmatpush.bf16.msra.mxu0 %v749
        %787 = vmatpush.bf16.msra.mxu0 %v748
        %788 = vmatpush.bf16.msra.mxu0 %v747
        %789 = vmatpush.bf16.msra.mxu0 %v746
        %790 = vmatpush.bf16.msra.mxu0 %v745
        %791 = vmatmul.bf16.gmra.mxu0 %v477
        %v792 = vpop.f32.mrf.mxu0
        %v793 = vadd.f32 %v779, %v792
        %v794 = vpop.f32.mrf.mxu0
        %v795 = vadd.f32 %v781, %v794
        %796 = vdwg.mxu0
        %v797 = vld [vmem:[%s3] sm:$0x1]
        %v799 = vperm.slane %v797, 0
        %v801 = vadd.f32 %v793, %v799
        %v802 = vadd.f32 %v795, %v799
        %s803 = sld [smem:[#allocation2]]
        %vm804 = vcmp.ge.f32.partialorder %v801, 0.0
        %vm805 = vcmp.ge.f32.partialorder %v802, 0.0
        %v806 = vstv %s803
        %v807 = vmul.f32 %v806, %v801
        %v808 = vmul.f32 %v806, %v802
        %v809 = vsel %vm804, %v801, %v807
        %v810 = vsel %vm805, %v802, %v808
        %v811 = vpack.c.bf16 %v810, %v809
        %v812 = vld [vmem:[%s4] sm:$0xf]
        %v813 = vld [vmem:[%s4 + $0x4] sm:$0xf]
        %v814 = vld [vmem:[%s4 + $0x8] sm:$0xf]
        %v815 = vld [vmem:[%s4 + $0xc] sm:$0xf]
        %v816 = vld [vmem:[%s4 + $0x10] sm:$0xf]
        %v817 = vld [vmem:[%s4 + $0x14] sm:$0xf]
        %v818 = vld [vmem:[%s4 + $0x18] sm:$0xf]
        %v819 = vld [vmem:[%s4 + $0x1c] sm:$0xf]
        %v820 = vld [vmem:[%s4 + $0x20] sm:$0xf]
        %v821 = vld [vmem:[%s4 + $0x24] sm:$0xf]
        %v822 = vld [vmem:[%s4 + $0x28] sm:$0xf]
        %v823 = vld [vmem:[%s4 + $0x2c] sm:$0xf]
        %v824 = vld [vmem:[%s4 + $0x30] sm:$0xf]
        %v825 = vld [vmem:[%s4 + $0x34] sm:$0xf]
        %v826 = vld [vmem:[%s4 + $0x38] sm:$0xf]
        %v827 = vld [vmem:[%s4 + $0x3c] sm:$0xf]
        %v828 = vld [vmem:[%s5] sm:$0x1]
        %v830 = vperm.slane %v828, 0
        %v848 = vunpack.c.l.b16 %v812
        %v849 = vunpack.c.l.b16 %v813
        %v850 = vunpack.c.l.b16 %v814
        %v851 = vunpack.c.l.b16 %v815
        %v852 = vunpack.c.l.b16 %v816
        %v853 = vunpack.c.l.b16 %v817
        %v854 = vunpack.c.l.b16 %v818
        %v855 = vunpack.c.l.b16 %v819
        %v856 = vunpack.c.l.b16 %v820
        %v857 = vunpack.c.l.b16 %v821
        %v858 = vunpack.c.l.b16 %v822
        %v859 = vunpack.c.l.b16 %v823
        %v860 = vunpack.c.l.b16 %v824
        %v861 = vunpack.c.l.b16 %v825
        %v862 = vunpack.c.l.b16 %v826
        %v863 = vunpack.c.l.b16 %v827
        %v864 = vpack.c.b16 %v849, %v848
        %v865 = vpack.c.b16 %v851, %v850
        %v866 = vpack.c.b16 %v853, %v852
        %v867 = vpack.c.b16 %v855, %v854
        %v868 = vpack.c.b16 %v857, %v856
        %v869 = vpack.c.b16 %v859, %v858
        %v870 = vpack.c.b16 %v861, %v860
        %v871 = vpack.c.b16 %v863, %v862
        %880 = vmatpush.bf16.msra.mxu0 %v871
        %881 = vmatpush.bf16.msra.mxu0 %v870
        %882 = vmatpush.bf16.msra.mxu0 %v869
        %883 = vmatpush.bf16.msra.mxu0 %v868
        %884 = vmatpush.bf16.msra.mxu0 %v867
        %885 = vmatpush.bf16.msra.mxu0 %v866
        %886 = vmatpush.bf16.msra.mxu0 %v865
        %887 = vmatpush.bf16.msra.mxu0 %v864
        %888 = vmatmul.bf16.gmra.mxu0 %v811
        %v889 = vpop.f32.mrf.mxu0
        %v890 = vadd.f32 %v830, %v889
        %v891 = vpop.f32.mrf.mxu0
        %v892 = vadd.f32 %v830, %v891
        %893 = vdwg.mxu0
        %v894 = vlaneseq
        %v895 = vand.u32 %v894, 127
        %vm896 = vcmp.lt.s32.totalorder %v895, 32
        %v897 = vsel %vm896, 1, 0
        %v898 = vcvt.s32.f32 %v897
        %899 = vadd.xlane.f32.xlu0 %v890
        %v900 = vpop.xlane.xlu0 %899
        %901 = vadd.xlane.f32.xlu0 %v892
        %v902 = vpop.xlane.xlu0 %901
        %v903 = vmul.f32 %v900, 0.03125
        %v904 = vmul.f32 %v902, 0.03125
        %v905 = vsub.f32 %v890, %v903
        %v906 = vsub.f32 %v892, %v904
        %v907 = vmul.f32 %v905, %v898
        %v908 = vmul.f32 %v906, %v898
        %v909 = vmul.f32 %v907, %v907
        %v910 = vmul.f32 %v908, %v908
        %911 = vadd.xlane.f32.xlu0 %v909
        %v912 = vpop.xlane.xlu0 %911
        %913 = vadd.xlane.f32.xlu0 %v910
        %v914 = vpop.xlane.xlu0 %913
        %v915 = vmul.f32 %v912, 0.03125
        %v916 = vmul.f32 %v914, 0.03125
        %v917 = vrsqrt.pop %v915
        %v918 = vmul.f32 %v917, %v915
        %v919 = vmul.f32 %v918, %v917
        %v920 = vmul.f32 0.5, %v919
        %v921 = vsub.f32 1.5, %v920
        %v922 = vmul.f32 %v917, %v921
        %v923 = vmul.f32 %v915, %v922
        %vm924 = vcmp.eq.f32.partialorder %v915, inf
        %v925 = vsel %vm924, %v915, %v923
        %vm926 = vcmp.eq.f32.partialorder %v915, 0.0
        %v927 = vand.u32 %v915, 2147483648
        %v928 = vsel %vm926, %v927, %v925
        %v929 = vrsqrt.pop %v916
        %v930 = vmul.f32 %v929, %v916
        %v931 = vmul.f32 %v930, %v929
        %v932 = vmul.f32 0.5, %v931
        %v933 = vsub.f32 1.5, %v932
        %v934 = vmul.f32 %v929, %v933
        %v935 = vmul.f32 %v916, %v934
        %vm936 = vcmp.eq.f32.partialorder %v916, inf
        %v937 = vsel %vm936, %v916, %v935
        %vm938 = vcmp.eq.f32.partialorder %v916, 0.0
        %v939 = vand.u32 %v916, 2147483648
        %v940 = vsel %vm938, %v939, %v937
        %v941 = vadd.f32 %v928, 0.0001
        %v942 = vadd.f32 %v940, 0.0001
        %v943 = vrcp.pop %v941
        %v944 = vrcp.pop %v942
        %v945 = vmul.f32 %v907, %v943
        %v946 = vmul.f32 %v908, %v944
        %v947 = vld [vmem:[%s6] sm:$0x1]
        %v949 = vperm.slane %v947, 0
        %v951 = vmul.f32 %v949, %v945
        %v952 = vmul.f32 %v949, %v946
        %v953 = vld [vmem:[%s7] sm:$0x1]
        %v955 = vperm.slane %v953, 0
        %v957 = vadd.f32 %v951, %v955
        %v958 = vadd.f32 %v952, %v955
        %s959 = sld [smem:[#allocation2 + $0x1]]
        %vm960 = vcmp.ge.f32.partialorder %v957, 0.0
        %vm961 = vcmp.ge.f32.partialorder %v958, 0.0
        %v962 = vstv %s959
        %v963 = vmul.f32 %v962, %v957
        %v964 = vmul.f32 %v962, %v958
        %v965 = vsel %vm960, %v957, %v963
        %v966 = vsel %vm961, %v958, %v964
        %v967 = vpack.c.bf16 %v965, %v965
        %v968 = vpack.c.bf16 %v966, %v966
        %969 = vst [vmem:[%s433] sm:$0xf] %v967
        %970 = vst [vmem:[%s433 + $0x4] sm:$0xf] %v968
        %s971 = smul.u32 2, %s26
        %p972 = scmp.lt.s32.totalorder %s25, 1
        %s973 = scalar_select %p972, %s25, 1
        %p974 = scmp.lt.s32.totalorder %s971, 1
        %s975 = scalar_select %p974, %s971, 1
        %s976 = smul.addr %s973, 2
        %s977 = sadd.s32 %s975, %s976
        %s978 = smul.addr %s977, 4
        %s979 = scalar_lea.vmem %s9, %s978
        // Predicated region
        $region61: #{_lambda_.4} parent=55 // pred_check
          %p980 = pneg %p258
        $region62: #{_lambda_.4} parent=55 // pred_check_branch
          %982 = sbr.rel (%p980) target = $region64
        $region63: #{_lambda_.4} parent=55 // pred_region
          %s983 = smul.u32 2, %s26
        $region64: #{_lambda_.4} parent=55 // pred_fallthru
          _
      $region56: #{_lambda_.4} parent=5 // pred_fallthru
        _
      %p984 = scmp.le.s32.totalorder 2, %s16
      // Predicated region
      $region65: #{_lambda_.4} parent=5 // pred_check
        %p985 = pneg %p984
      $region66: #{_lambda_.4} parent=5 // pred_check_branch
        %987 = sbr.rel (%p985) target = $region68
      $region67: #{_lambda_.4} parent=5 // pred_region
        %s988 = ssub.s32 %s16, 2
        // Predicated region
        $region69: #{_lambda_.4} parent=67 // pred_check
          %p989 = pneg %p264
        $region70: #{_lambda_.4} parent=67 // pred_check_branch
          %991 = sbr.rel (%p989) target = $region72
        $region71: #{_lambda_.4} parent=67 // pred_region
          %s992 = smul.u32 2, %s28
          %p993 = scmp.lt.s32.totalorder %s27, 1
          %s994 = scalar_select %p993, %s27, 1
          %p995 = scmp.lt.s32.totalorder %s992, 1
          %s996 = scalar_select %p995, %s992, 1
          %s997 = smul.addr %s994, 2
          %s998 = sadd.s32 %s996, %s997
          %s999 = smul.addr %s998, 4
          %s1000 = scalar_lea.vmem %s9, %s999
        $region72: #{_lambda_.4} parent=67 // pred_fallthru
          _
      $region68: #{_lambda_.4} parent=5 // pred_fallthru
        _
    $region6: #{_lambda_.4} parent=1 // loop_footer
      %s20 = sadd.s32 1, %s16
    $region7: #{_lambda_.4} parent=1 // loop_footer_branch
      %15 = sbr.rel target = $region3
    $region8: #{_lambda_.4} parent=1 // loop_exit
      _
    %1001 = vsyncpa [#allocation3], 1
    %s1002 = scalar_lea.sflag [#allocation3], 1
    %1003 = vsyncpa %s1002, 1

// kernel: _lambda_.3
$region0: #{_lambda_.3}
  #allocation0 [shape = 'u32[]', space=smem, size = 0x4, offset = 0x4, fixed_abs, tag = 'smem constant byte address 0x4 - core index']
  #allocation1 [shape = 'u32[72,128]{1,0:T(1,128)}', space=vmem, size = 0x9000, scoped, tag = 'internal scratch']
  %s0 = inlined_call_operand.vmem [shape: bf16[2,48,128], index: 0, kind: input, shape index: {}, may-alias: {0,1}]
  %s1 = inlined_call_operand.vmem [shape: bf16[2,48,128], index: 1, kind: input, shape index: {}, may-alias: {0,1}]
  %s2 = inlined_call_operand.hbm [shape: bf16[3,128,128], index: 2, kind: input, shape index: {}]
  %s3 = inlined_call_operand.vmem [shape: f32[1,128], index: 3, kind: input, shape index: {}]
  %s4 = inlined_call_operand.vmem [shape: bf16[128,128], index: 4, kind: input, shape index: {}]
  %s5 = inlined_call_operand.vmem [shape: f32[1,128], index: 5, kind: input, shape index: {}]
  %s6 = inlined_call_operand.hbm [shape: f32[1,128], index: 6, kind: input, shape index: {}]
  %s7 = inlined_call_operand.vmem [shape: f32[1,128], index: 7, kind: input, shape index: {}]
  %s8 = inlined_call_operand.vmem [shape: f32[2], index: 8, kind: input, shape index: {}]
  %s9 = inlined_call_operand.vmem [shape: bf16[2,32,128], index: 9, kind: output, shape index: {}]
  %s10 = sld [smem:[#allocation0]]
  $region81: #{_lambda_.3} parent=0
    _
  %s12 = ssub.s32 1, %s10
  %s13 = scalar_select 0, %s12, %s10
  $region1: #{_lambda_.3} parent=0
    #allocation2 [shape = 'u8[98304]{0}', space=vmem, size = 0x18000, scoped, tag = 'input window, operand 2, single buffered']
    #allocation3 [shape = 's32[2]{0}', space=sflag, size = 0x8, scoped, tag = 'scoped memory for _lambda_.3']
    #allocation4 [shape = 's32[2]{0}', space=sflag, size = 0x8, scoped, tag = 'scoped memory for _lambda_.3']
    #allocation5 [shape = 'u8[512]{0}', space=vmem, size = 0x400, scoped, tag = 'input window, operand 6, single buffered']
    #allocation6 [shape = 's32[1]{0}', space=sflag, size = 0x4, scoped, tag = 'scoped memory for _lambda_.3']
    #allocation7 [shape = 'u8[512]{0}', space=smem, size = 0x200, scoped, tag = 'input window, operand 8, single buffered']
    %14 = vsyncpa [#allocation3], 0
    %15 = vsyncpa [#allocation6], 0
    %16 = vsyncpa [#allocation4], 0
    loop: start=0, step=1, limit=4
    $region2: #{_lambda_.3} parent=1 // loop_pre_header
      _
    $region3: #{_lambda_.3} parent=1 // loop_header
      %s18 = sphi 0, %s22
      %p19 = scmp.ge.s32.totalorder %s18, 4
      %s25 = sphi 0, %s37
      %s26 = sphi 0, %s33
      %s27 = sphi 0, %s25
      %s28 = sphi 0, %s26
      %s29 = sphi 0, %s27
      %s30 = sphi 0, %s28
      %s42 = sphi 0, %s44
      %s45 = sphi 0, %s42
      %s46 = sphi 0, %s45
      %s62 = sphi 0, %s46
      %s74 = sphi 0, %s76
      %s77 = sphi 0, %s74
      %s78 = sphi 0, %s77
      %s94 = sphi 0, %s78
      %s98 = sphi 0, %s98
      %s100 = sphi 0, %s98
      %s101 = sphi 0, %s100
      %s115 = sphi 0, %s101
      %s119 = sphi 0, %s119
      %s121 = sphi 0, %s119
      %s122 = sphi 0, %s121
      %s136 = sphi 0, %s122
      %s140 = sphi 0, %s140
      %s142 = sphi 0, %s140
      %s143 = sphi 0, %s142
      %s157 = sphi 0, %s143
      %s161 = sphi 0, %s161
      %s163 = sphi 0, %s161
      %s164 = sphi 0, %s163
      %s178 = sphi 0, %s164
      %s182 = sphi 0, %s182
      %s184 = sphi 0, %s182
      %s185 = sphi 0, %s184
      %s199 = sphi 0, %s185
      %s203 = sphi 0, %s203
      %s205 = sphi 0, %s203
      %s206 = sphi 0, %s205
      %s220 = sphi 0, %s206
      %s224 = sphi 0, %s224
      %s226 = sphi 0, %s224
      %s227 = sphi 0, %s226
      %s241 = sphi 0, %s227
      %s249 = sphi 0, %s251
      %s252 = sphi 0, %s249
      %s253 = sphi 0, %s252
      %s269 = sphi 0, %s253
    $region4: #{_lambda_.3} parent=1 // loop_header_branch
      %21 = sbr.rel (%p19) target = $region8
    $region5: #{_lambda_.3} parent=1 // loop_body
      %s23 = ssub.s32 %s18, 1
      %s24 = ssub.s32 %s18, 2
      %s31 = sadd.s32 1, %s26
      %p32 = scmp.ge.s32.totalorder %s31, 1
      %s33 = scalar_select %p32, 0, %s31
      %s34 = sadd.s32 1, %s25
      %s35 = scalar_select %p32, %s34, %s25
      %p36 = scmp.ge.s32.totalorder %s35, 2
      %s37 = scalar_select %p36, 0, %s35
      %s38 = ssub.s32 %s25, %s37
      %s39 = ssub.s32 %s26, %s33
      %s40 = sor.u32 %s38, %s39
      %p41 = scmp.eq.s32.totalorder %s40, 0
      %s43 = sadd.s32 %s42, 1
      %s44 = scalar_select %p41, %s42, %s43
      %p47 = pneg %p41
      %p48 = scmp.eq.s32.totalorder %s18, 1
      %p49 = por %p47, %p48
      %p50 = scmp.ne.s32.totalorder %s42, %s45
      %p51 = scmp.eq.s32.totalorder %s18, 0
      %p52 = por %p50, %p51
      %p53 = scmp.ne.s32.totalorder %s42, %s45
      %p54 = scmp.eq.s32.totalorder %s23, 1
      %p55 = por %p53, %p54
      %p56 = scmp.ne.s32.totalorder %s45, %s46
      %p57 = scmp.eq.s32.totalorder %s23, 0
      %p58 = por %p56, %p57
      %p59 = scmp.ne.s32.totalorder %s45, %s46
      %p60 = scmp.eq.s32.totalorder %s24, 1
      %p61 = por %p59, %p60
      %p63 = scmp.ne.s32.totalorder %s46, %s62
      %p64 = scmp.eq.s32.totalorder %s24, 0
      %p65 = por %p63, %p64
      %s66 = sadd.s32 %s26, 1
      %s67 = smul.u32 %s66, 2
      %s68 = sadd.s32 %s33, 1
      %s69 = smul.u32 %s68, 2
      %s70 = ssub.s32 %s25, %s37
      %s71 = ssub.s32 %s67, %s69
      %s72 = sor.u32 %s70, %s71
      %p73 = scmp.eq.s32.totalorder %s72, 0
      %s75 = sadd.s32 %s74, 1
      %s76 = scalar_select %p73, %s74, %s75
      %p79 = pneg %p73
      %p80 = scmp.eq.s32.totalorder %s18, 1
      %p81 = por %p79, %p80
      %p82 = scmp.ne.s32.totalorder %s74, %s77
      %p83 = scmp.eq.s32.totalorder %s18, 0
      %p84 = por %p82, %p83
      %p85 = scmp.ne.s32.totalorder %s74, %s77
      %p86 = scmp.eq.s32.totalorder %s23, 1
      %p87 = por %p85, %p86
      %p88 = scmp.ne.s32.totalorder %s77, %s78
      %p89 = scmp.eq.s32.totalorder %s23, 0
      %p90 = por %p88, %p89
      %p91 = scmp.ne.s32.totalorder %s77, %s78
      %p92 = scmp.eq.s32.totalorder %s24, 1
      %p93 = por %p91, %p92
      %p95 = scmp.ne.s32.totalorder %s78, %s94
      %p96 = scmp.eq.s32.totalorder %s24, 0
      %p97 = por %p95, %p96
      %s99 = sadd.s32 %s98, 1
      %p102 = scmp.eq.s32.totalorder %s18, 1
      %p103 = scmp.ne.s32.totalorder %s98, %s100
      %p104 = scmp.eq.s32.totalorder %s18, 0
      %p105 = por %p103, %p104
      %p106 = scmp.ne.s32.totalorder %s98, %s100
      %p107 = scmp.eq.s32.totalorder %s23, 1
      %p108 = por %p106, %p107
      %p109 = scmp.ne.s32.totalorder %s100, %s101
      %p110 = scmp.eq.s32.totalorder %s23, 0
      %p111 = por %p109, %p110
      %p112 = scmp.ne.s32.totalorder %s100, %s101
      %p113 = scmp.eq.s32.totalorder %s24, 1
      %p114 = por %p112, %p113
      %p116 = scmp.ne.s32.totalorder %s101, %s115
      %p117 = scmp.eq.s32.totalorder %s24, 0
      %p118 = por %p116, %p117
      %s120 = sadd.s32 %s119, 1
      %p123 = scmp.eq.s32.totalorder %s18, 1
      %p124 = scmp.ne.s32.totalorder %s119, %s121
      %p125 = scmp.eq.s32.totalorder %s18, 0
      %p126 = por %p124, %p125
      %p127 = scmp.ne.s32.totalorder %s119, %s121
      %p128 = scmp.eq.s32.totalorder %s23, 1
      %p129 = por %p127, %p128
      %p130 = scmp.ne.s32.totalorder %s121, %s122
      %p131 = scmp.eq.s32.totalorder %s23, 0
      %p132 = por %p130, %p131
      %p133 = scmp.ne.s32.totalorder %s121, %s122
      %p134 = scmp.eq.s32.totalorder %s24, 1
      %p135 = por %p133, %p134
      %p137 = scmp.ne.s32.totalorder %s122, %s136
      %p138 = scmp.eq.s32.totalorder %s24, 0
      %p139 = por %p137, %p138
      %s141 = sadd.s32 %s140, 1
      %p144 = scmp.eq.s32.totalorder %s18, 1
      %p145 = scmp.ne.s32.totalorder %s140, %s142
      %p146 = scmp.eq.s32.totalorder %s18, 0
      %p147 = por %p145, %p146
      %p148 = scmp.ne.s32.totalorder %s140, %s142
      %p149 = scmp.eq.s32.totalorder %s23, 1
      %p150 = por %p148, %p149
      %p151 = scmp.ne.s32.totalorder %s142, %s143
      %p152 = scmp.eq.s32.totalorder %s23, 0
      %p153 = por %p151, %p152
      %p154 = scmp.ne.s32.totalorder %s142, %s143
      %p155 = scmp.eq.s32.totalorder %s24, 1
      %p156 = por %p154, %p155
      %p158 = scmp.ne.s32.totalorder %s143, %s157
      %p159 = scmp.eq.s32.totalorder %s24, 0
      %p160 = por %p158, %p159
      %s162 = sadd.s32 %s161, 1
      %p165 = scmp.eq.s32.totalorder %s18, 1
      %p166 = scmp.ne.s32.totalorder %s161, %s163
      %p167 = scmp.eq.s32.totalorder %s18, 0
      %p168 = por %p166, %p167
      %p169 = scmp.ne.s32.totalorder %s161, %s163
      %p170 = scmp.eq.s32.totalorder %s23, 1
      %p171 = por %p169, %p170
      %p172 = scmp.ne.s32.totalorder %s163, %s164
      %p173 = scmp.eq.s32.totalorder %s23, 0
      %p174 = por %p172, %p173
      %p175 = scmp.ne.s32.totalorder %s163, %s164
      %p176 = scmp.eq.s32.totalorder %s24, 1
      %p177 = por %p175, %p176
      %p179 = scmp.ne.s32.totalorder %s164, %s178
      %p180 = scmp.eq.s32.totalorder %s24, 0
      %p181 = por %p179, %p180
      %s183 = sadd.s32 %s182, 1
      %p186 = scmp.eq.s32.totalorder %s18, 1
      %p187 = scmp.ne.s32.totalorder %s182, %s184
      %p188 = scmp.eq.s32.totalorder %s18, 0
      %p189 = por %p187, %p188
      %p190 = scmp.ne.s32.totalorder %s182, %s184
      %p191 = scmp.eq.s32.totalorder %s23, 1
      %p192 = por %p190, %p191
      %p193 = scmp.ne.s32.totalorder %s184, %s185
      %p194 = scmp.eq.s32.totalorder %s23, 0
      %p195 = por %p193, %p194
      %p196 = scmp.ne.s32.totalorder %s184, %s185
      %p197 = scmp.eq.s32.totalorder %s24, 1
      %p198 = por %p196, %p197
      %p200 = scmp.ne.s32.totalorder %s185, %s199
      %p201 = scmp.eq.s32.totalorder %s24, 0
      %p202 = por %p200, %p201
      %s204 = sadd.s32 %s203, 1
      %p207 = scmp.eq.s32.totalorder %s18, 1
      %p208 = scmp.ne.s32.totalorder %s203, %s205
      %p209 = scmp.eq.s32.totalorder %s18, 0
      %p210 = por %p208, %p209
      %p211 = scmp.ne.s32.totalorder %s203, %s205
      %p212 = scmp.eq.s32.totalorder %s23, 1
      %p213 = por %p211, %p212
      %p214 = scmp.ne.s32.totalorder %s205, %s206
      %p215 = scmp.eq.s32.totalorder %s23, 0
      %p216 = por %p214, %p215
      %p217 = scmp.ne.s32.totalorder %s205, %s206
      %p218 = scmp.eq.s32.totalorder %s24, 1
      %p219 = por %p217, %p218
      %p221 = scmp.ne.s32.totalorder %s206, %s220
      %p222 = scmp.eq.s32.totalorder %s24, 0
      %p223 = por %p221, %p222
      %s225 = sadd.s32 %s224, 1
      %p228 = scmp.eq.s32.totalorder %s18, 1
      %p229 = scmp.ne.s32.totalorder %s224, %s226
      %p230 = scmp.eq.s32.totalorder %s18, 0
      %p231 = por %p229, %p230
      %p232 = scmp.ne.s32.totalorder %s224, %s226
      %p233 = scmp.eq.s32.totalorder %s23, 1
      %p234 = por %p232, %p233
      %p235 = scmp.ne.s32.totalorder %s226, %s227
      %p236 = scmp.eq.s32.totalorder %s23, 0
      %p237 = por %p235, %p236
      %p238 = scmp.ne.s32.totalorder %s226, %s227
      %p239 = scmp.eq.s32.totalorder %s24, 1
      %p240 = por %p238, %p239
      %p242 = scmp.ne.s32.totalorder %s227, %s241
      %p243 = scmp.eq.s32.totalorder %s24, 0
      %p244 = por %p242, %p243
      %s245 = ssub.s32 %s25, %s37
      %s246 = ssub.s32 %s26, %s33
      %s247 = sor.u32 %s245, %s246
      %p248 = scmp.eq.s32.totalorder %s247, 0
      %s250 = sadd.s32 %s249, 1
      %s251 = scalar_select %p248, %s249, %s250
      %p254 = pneg %p248
      %p255 = scmp.eq.s32.totalorder %s18, 1
      %p256 = por %p254, %p255
      %p257 = scmp.ne.s32.totalorder %s249, %s252
      %p258 = scmp.eq.s32.totalorder %s18, 0
      %p259 = por %p257, %p258
      %p260 = scmp.ne.s32.totalorder %s249, %s252
      %p261 = scmp.eq.s32.totalorder %s23, 1
      %p262 = por %p260, %p261
      %p263 = scmp.ne.s32.totalorder %s252, %s253
      %p264 = scmp.eq.s32.totalorder %s23, 0
      %p265 = por %p263, %p264
      %p266 = scmp.ne.s32.totalorder %s252, %s253
      %p267 = scmp.eq.s32.totalorder %s24, 1
      %p268 = por %p266, %p267
      %p270 = scmp.ne.s32.totalorder %s253, %s269
      %p271 = scmp.eq.s32.totalorder %s24, 0
      %p272 = por %p270, %p271
      %p273 = scmp.le.s32.totalorder 1, %s18
      %p274 = scmp.lt.s32.totalorder %s18, 3
      %p275 = pnand %p273, %p274
      %p276 = pneg %p275
      // Predicated region
      $region9: #{_lambda_.3} parent=5 // pred_check
        _
      $region10: #{_lambda_.3} parent=5 // pred_check_branch
        %278 = sbr.rel (%p275) target = $region12
      $region11: #{_lambda_.3} parent=5 // pred_region
        %s279 = ssub.s32 %s18, 1
        // Predicated region
        $region13: #{_lambda_.3} parent=11 // pred_check
          %p280 = pneg %p111
        $region14: #{_lambda_.3} parent=11 // pred_check_branch
          %282 = sbr.rel (%p280) target = $region16
        $region15: #{_lambda_.3} parent=11 // pred_region
          %284 = vsyncadd [#allocation3], 0
          %s285 = sshll.u32 %s2, 4
          %s286 = int_to_ptr.hbm [resolvable:$true] %s285
          %s287 = sshll.u32 [#allocation2], 4
          %s288 = int_to_ptr.vmem [resolvable:$true] %s287
          %293 = dma.hbm_to_vmem [thread:$0]  %s286, 3072, %s288, [#allocation3], 64, 64, 4
        $region16: #{_lambda_.3} parent=11 // pred_fallthru
          _
        // Predicated region
        $region17: #{_lambda_.3} parent=11 // pred_check
          %p294 = pneg %p132
        $region18: #{_lambda_.3} parent=11 // pred_check_branch
          %296 = sbr.rel (%p294) target = $region20
        $region19: #{_lambda_.3} parent=11 // pred_region
          _
        $region20: #{_lambda_.3} parent=11 // pred_fallthru
          _
        // Predicated region
        $region21: #{_lambda_.3} parent=11 // pred_check
          %p297 = pneg %p153
        $region22: #{_lambda_.3} parent=11 // pred_check_branch
          %299 = sbr.rel (%p297) target = $region24
        $region23: #{_lambda_.3} parent=11 // pred_region
          _
        $region24: #{_lambda_.3} parent=11 // pred_fallthru
          _
        // Predicated region
        $region25: #{_lambda_.3} parent=11 // pred_check
          %p300 = pneg %p174
        $region26: #{_lambda_.3} parent=11 // pred_check_branch
          %302 = sbr.rel (%p300) target = $region28
        $region27: #{_lambda_.3} parent=11 // pred_region
          _
        $region28: #{_lambda_.3} parent=11 // pred_fallthru
          _
        // Predicated region
        $region29: #{_lambda_.3} parent=11 // pred_check
          %p303 = pneg %p195
        $region30: #{_lambda_.3} parent=11 // pred_check_branch
          %305 = sbr.rel (%p303) target = $region32
        $region31: #{_lambda_.3} parent=11 // pred_region
          %307 = vsyncadd [#allocation6], 0
          %s309 = sshll.u32 %s6, 4
          %s310 = int_to_ptr.hbm [resolvable:$true] %s309
          %s311 = sshll.u32 [#allocation5], 4
          %s312 = int_to_ptr.vmem [resolvable:$true] %s311
          %314 = dma.hbm_to_vmem [thread:$0]  %s310, 16, %s312, [#allocation6]
        $region32: #{_lambda_.3} parent=11 // pred_fallthru
          _
        // Predicated region
        $region33: #{_lambda_.3} parent=11 // pred_check
          %p315 = pneg %p216
        $region34: #{_lambda_.3} parent=11 // pred_check_branch
          %317 = sbr.rel (%p315) target = $region36
        $region35: #{_lambda_.3} parent=11 // pred_region
          _
        $region36: #{_lambda_.3} parent=11 // pred_fallthru
          _
        // Predicated region
        $region37: #{_lambda_.3} parent=11 // pred_check
          %p318 = pneg %p237
        $region38: #{_lambda_.3} parent=11 // pred_check_branch
          %320 = sbr.rel (%p318) target = $region40
        $region39: #{_lambda_.3} parent=11 // pred_region
          %322 = vsyncadd [#allocation4], 0
          %s324 = sshll.u32 %s8, 4
          %s325 = int_to_ptr.vmem [resolvable:$true] %s324
          %327 = dma.vmem_to_smem %s325, 16, [#allocation7], [#allocation4]
        $region40: #{_lambda_.3} parent=11 // pred_fallthru
          _
      $region12: #{_lambda_.3} parent=5 // pred_fallthru
        _
      %p328 = scmp.lt.s32.totalorder %s18, 2
      // Predicated region
      $region41: #{_lambda_.3} parent=5 // pred_check
        %p329 = pneg %p328
      $region42: #{_lambda_.3} parent=5 // pred_check_branch
        %331 = sbr.rel (%p329) target = $region44
      $region43: #{_lambda_.3} parent=5 // pred_region
        // Predicated region
        $region45: #{_lambda_.3} parent=43 // pred_check
          %p332 = pneg %p52
        $region46: #{_lambda_.3} parent=43 // pred_check_branch
          %334 = sbr.rel (%p332) target = $region48
        $region47: #{_lambda_.3} parent=43 // pred_region
          %s335 = smul.u32 4, %s26
          %s336 = ssub.s32 6, %s335
          %p337 = scmp.lt.s32.totalorder %s336, 4
          %s338 = scalar_select %p337, %s336, 4
          %s339 = smul.u32 4, %s338
          %p340 = scmp.lt.s32.totalorder %s25, 1
          %s341 = scalar_select %p340, %s25, 1
          %p342 = scmp.lt.s32.totalorder %s335, 5
          %s343 = scalar_select %p342, %s335, 5
          %s344 = smul.addr %s341, 6
          %s345 = sadd.s32 %s343, %s344
          %s346 = smul.addr %s345, 4
          %s347 = scalar_lea.vmem %s0, %s346
          %s348 = smul.u32 4, %s26
          %s349 = ssub.s32 6, %s348
          %p350 = scmp.lt.s32.totalorder %s349, 4
          %s351 = scalar_select %p350, %s349, 4
          %s352 = smul.u32 4, %s351
        $region48: #{_lambda_.3} parent=43 // pred_fallthru
          _
        // Predicated region
        $region49: #{_lambda_.3} parent=43 // pred_check
          %p353 = pneg %p84
        $region50: #{_lambda_.3} parent=43 // pred_check_branch
          %355 = sbr.rel (%p353) target = $region52
        $region51: #{_lambda_.3} parent=43 // pred_region
          %s356 = sadd.s32 %s26, 1
          %s357 = smul.u32 %s356, 2
          %s358 = smul.u32 2, %s357
          %p359 = scmp.lt.s32.totalorder %s25, 1
          %s360 = scalar_select %p359, %s25, 1
          %p361 = scmp.lt.s32.totalorder %s358, 5
          %s362 = scalar_select %p361, %s358, 5
          %s363 = smul.addr %s360, 6
          %s364 = sadd.s32 %s362, %s363
          %s365 = smul.addr %s364, 4
          %s366 = scalar_lea.vmem %s1, %s365
          %s367 = sadd.s32 %s26, 1
          %s368 = smul.u32 %s367, 2
          %s369 = smul.u32 2, %s368
        $region52: #{_lambda_.3} parent=43 // pred_fallthru
          _
      $region44: #{_lambda_.3} parent=5 // pred_fallthru
        _
      %p370 = scmp.le.s32.totalorder 1, %s18
      %p371 = scmp.lt.s32.totalorder %s18, 3
      %p372 = pnand %p370, %p371
      %p373 = pneg %p372
      // Predicated region
      $region53: #{_lambda_.3} parent=5 // pred_check
        _
      $region54: #{_lambda_.3} parent=5 // pred_check_branch
        %375 = sbr.rel (%p372) target = $region56
      $region55: #{_lambda_.3} parent=5 // pred_region
        %s376 = ssub.s32 %s18, 1
        // Predicated region
        $region57: #{_lambda_.3} parent=55 // pred_check
          %p377 = pneg %p111
        $region58: #{_lambda_.3} parent=55 // pred_check_branch
          %379 = sbr.rel (%p377) target = $region60
        $region59: #{_lambda_.3} parent=55 // pred_region
          %381 = dma.done [#allocation3], 3072
        $region60: #{_lambda_.3} parent=55 // pred_fallthru
          _
        // Predicated region
        $region61: #{_lambda_.3} parent=55 // pred_check
          %p382 = pneg %p195
        $region62: #{_lambda_.3} parent=55 // pred_check_branch
          %384 = sbr.rel (%p382) target = $region64
        $region63: #{_lambda_.3} parent=55 // pred_region
          %386 = dma.done [#allocation6], 16
        $region64: #{_lambda_.3} parent=55 // pred_fallthru
          _
        // Predicated region
        $region65: #{_lambda_.3} parent=55 // pred_check
          %p387 = pneg %p237
        $region66: #{_lambda_.3} parent=55 // pred_check_branch
          %389 = sbr.rel (%p387) target = $region68
        $region67: #{_lambda_.3} parent=55 // pred_region
          %391 = dma.done [#allocation4], 16
        $region68: #{_lambda_.3} parent=55 // pred_fallthru
          _
        %392 = sfence
        %s393 = smul.u32 4, %s28
        %s394 = ssub.s32 6, %s393
        %p395 = scmp.lt.s32.totalorder %s394, 4
        %s396 = scalar_select %p395, %s394, 4
        %s397 = smul.u32 4, %s396
        %p398 = scmp.lt.s32.totalorder %s27, 1
        %s399 = scalar_select %p398, %s27, 1
        %p400 = scmp.lt.s32.totalorder %s393, 5
        %s401 = scalar_select %p400, %s393, 5
        %s402 = smul.addr %s399, 6
        %s403 = sadd.s32 %s401, %s402
        %s404 = smul.addr %s403, 4
        %s405 = scalar_lea.vmem %s0, %s404
        %p406 = pneg %p58
        %p407 = pneg %p55
        %s408 = sadd.s32 %s28, 1
        %s409 = smul.u32 %s408, 2
        %s410 = smul.u32 2, %s409
        %p411 = scmp.lt.s32.totalorder %s27, 1
        %s412 = scalar_select %p411, %s27, 1
        %p413 = scmp.lt.s32.totalorder %s410, 5
        %s414 = scalar_select %p413, %s410, 5
        %s415 = smul.addr %s412, 6
        %s416 = sadd.s32 %s414, %s415
        %s417 = smul.addr %s416, 4
        %s418 = scalar_lea.vmem %s1, %s417
        %p419 = pneg %p90
        %p420 = pneg %p87
        %p421 = pneg %p111
        %p422 = pneg %p108
        %p423 = pneg %p132
        %p424 = pneg %p129
        %p425 = pneg %p153
        %p426 = pneg %p150
        %p427 = pneg %p174
        %p428 = pneg %p171
        %p429 = pneg %p195
        %p430 = pneg %p192
        %p431 = pneg %p216
        %p432 = pneg %p213
        %p433 = pneg %p237
        %p434 = pneg %p234
        %p435 = pneg %p265
        %p436 = pneg %p262
        %s437 = smul.u32 4, %s28
        %p438 = scmp.lt.s32.totalorder %s27, 1
        %s439 = scalar_select %p438, %s27, 1
        %p440 = scmp.lt.s32.totalorder %s437, 3
        %s441 = scalar_select %p440, %s437, 3
        %s442 = smul.addr %s439, 4
        %s443 = sadd.s32 %s441, %s442
        %s444 = smul.addr %s443, 4
        %s445 = scalar_lea.vmem %s9, %s444
        %s446 = smul.u32 4, %s28
        %s447 = ssub.s32 6, %s446
        %p448 = scmp.lt.s32.totalorder %s447, 4
        %s449 = scalar_select %p448, %s447, 4
        %s450 = smul.u32 4, %s449
        %p451 = scmp.lt.s32.totalorder %s27, 1
        %s452 = scalar_select %p451, %s27, 1
        %p453 = scmp.lt.s32.totalorder %s446, 5
        %s454 = scalar_select %p453, %s446, 5
        %s455 = smul.addr %s452, 6
        %s456 = sadd.s32 %s454, %s455
        %s457 = smul.addr %s456, 4
        %s458 = scalar_lea.vmem %s0, %s457
        %s459 = smul.u32 4, %s28
        %s460 = ssub.s32 6, %s459
        %p461 = scmp.lt.s32.totalorder %s460, 4
        %s462 = scalar_select %p461, %s460, 4
        %s463 = smul.u32 4, %s462
        %s464 = sadd.s32 %s28, 1
        %s465 = smul.u32 %s464, 2
        %s466 = smul.u32 2, %s465
        %p467 = scmp.lt.s32.totalorder %s27, 1
        %s468 = scalar_select %p467, %s27, 1
        %p469 = scmp.lt.s32.totalorder %s466, 5
        %s470 = scalar_select %p469, %s466, 5
        %s471 = smul.addr %s468, 6
        %s472 = sadd.s32 %s470, %s471
        %s473 = smul.addr %s472, 4
        %s474 = scalar_lea.vmem %s1, %s473
        %s475 = sadd.s32 %s28, 1
        %s476 = smul.u32 %s475, 2
        %s477 = smul.u32 2, %s476
        %s478 = smul.u32 4, %s28
        %p479 = scmp.lt.s32.totalorder %s27, 1
        %s480 = scalar_select %p479, %s27, 1
        %p481 = scmp.lt.s32.totalorder %s478, 3
        %s482 = scalar_select %p481, %s478, 3
        %s483 = smul.addr %s480, 4
        %s484 = sadd.s32 %s482, %s483
        %s485 = smul.addr %s484, 4
        %s486 = scalar_lea.vmem %s9, %s485
        %s487 = smul.u32 4, %s28
        %v488 = vld [vmem:[%s458] sm:$0xf]
        %v489 = vld [vmem:[%s458 + $0x4] sm:$0xf]
        %v490 = vld [vmem:[%s458 + $0x8] sm:$0xf]
        %v491 = vld [vmem:[%s458 + $0xc] sm:$0xf]
        %v492 = vld [vmem:[#allocation2] sm:$0xf]
        %v493 = vld [vmem:[#allocation2 + $0x4] sm:$0xf]
        %v494 = vld [vmem:[#allocation2 + $0x8] sm:$0xf]
        %v495 = vld [vmem:[#allocation2 + $0xc] sm:$0xf]
        %v496 = vld [vmem:[#allocation2 + $0x10] sm:$0xf]
        %v497 = vld [vmem:[#allocation2 + $0x14] sm:$0xf]
        %v498 = vld [vmem:[#allocation2 + $0x18] sm:$0xf]
        %v499 = vld [vmem:[#allocation2 + $0x1c] sm:$0xf]
        %v500 = vld [vmem:[#allocation2 + $0x20] sm:$0xf]
        %v501 = vld [vmem:[#allocation2 + $0x24] sm:$0xf]
        %v502 = vld [vmem:[#allocation2 + $0x28] sm:$0xf]
        %v503 = vld [vmem:[#allocation2 + $0x2c] sm:$0xf]
        %v504 = vld [vmem:[#allocation2 + $0x30] sm:$0xf]
        %v505 = vld [vmem:[#allocation2 + $0x34] sm:$0xf]
        %v506 = vld [vmem:[#allocation2 + $0x38] sm:$0xf]
        %v507 = vld [vmem:[#allocation2 + $0x3c] sm:$0xf]
        %v508 = vld [vmem:[%s474] sm:$0x1]
        %v513 = vunpack.c.l.b16 %v488
        %v514 = vunpack.c.l.b16 %v489
        %v515 = vunpack.c.l.b16 %v490
        %v516 = vunpack.c.l.b16 %v491
        %v517 = vpack.c.b16 %v514, %v513
        %v518 = vpack.c.b16 %v516, %v515
        %vm519 = vsmask.f32 7424
        %v521 = vshrl.u32 %v517, 16
        %v523 = vshll.u32 %v517, 16
        %v525 = vrot.slane %v523, 1
        %v526 = vor.u32 %v521, %v525
        %v528 = vshll.u32 %v518, 16
        %v530 = vrot.slane %v528, 1
        %v531 = vsel %vm519, %v526, %v530
        %v532 = vshrl.u32 %v518, 16
        %v534 = vor.u32 %v532, %v530
        %v538 = vunpack.c.l.b16 %v508
        %v539 = vpack.c.b16 %v538, %v538
        %v541 = vshll.u32 %v539, 16
        %v543 = vrot.slane %v541, 1
        %vm545 = vcmask 1047552
        %vm546 = vmand %vm545, %vm519
        %v547 = vsel %vm546, %v534, %v543
        %s548 = scalar_lea.vmem [#allocation2], 64
        %v549 = vld [vmem:[%s548] sm:$0xf]
        %v550 = vld [vmem:[%s548 + $0x4] sm:$0xf]
        %v551 = vld [vmem:[%s548 + $0x8] sm:$0xf]
        %v552 = vld [vmem:[%s548 + $0xc] sm:$0xf]
        %v553 = vld [vmem:[%s548 + $0x10] sm:$0xf]
        %v554 = vld [vmem:[%s548 + $0x14] sm:$0xf]
        %v555 = vld [vmem:[%s548 + $0x18] sm:$0xf]
        %v556 = vld [vmem:[%s548 + $0x1c] sm:$0xf]
        %v557 = vld [vmem:[%s548 + $0x20] sm:$0xf]
        %v558 = vld [vmem:[%s548 + $0x24] sm:$0xf]
        %v559 = vld [vmem:[%s548 + $0x28] sm:$0xf]
        %v560 = vld [vmem:[%s548 + $0x2c] sm:$0xf]
        %v561 = vld [vmem:[%s548 + $0x30] sm:$0xf]
        %v562 = vld [vmem:[%s548 + $0x34] sm:$0xf]
        %v563 = vld [vmem:[%s548 + $0x38] sm:$0xf]
        %v564 = vld [vmem:[%s548 + $0x3c] sm:$0xf]
        %v581 = vunpack.c.l.b16 %v549
        %v582 = vunpack.c.l.b16 %v550
        %v583 = vunpack.c.l.b16 %v551
        %v584 = vunpack.c.l.b16 %v552
        %v585 = vunpack.c.l.b16 %v553
        %v586 = vunpack.c.l.b16 %v554
        %v587 = vunpack.c.l.b16 %v555
        %v588 = vunpack.c.l.b16 %v556
        %v589 = vunpack.c.l.b16 %v557
        %v590 = vunpack.c.l.b16 %v558
        %v591 = vunpack.c.l.b16 %v559
        %v592 = vunpack.c.l.b16 %v560
        %v593 = vunpack.c.l.b16 %v561
        %v594 = vunpack.c.l.b16 %v562
        %v595 = vunpack.c.l.b16 %v563
        %v596 = vunpack.c.l.b16 %v564
        %v597 = vpack.c.b16 %v582, %v581
        %v598 = vpack.c.b16 %v584, %v583
        %v599 = vpack.c.b16 %v586, %v585
        %v600 = vpack.c.b16 %v588, %v587
        %v601 = vpack.c.b16 %v590, %v589
        %v602 = vpack.c.b16 %v592, %v591
        %v603 = vpack.c.b16 %v594, %v593
        %v604 = vpack.c.b16 %v596, %v595
        %613 = vmatpush.bf16.msra.mxu0 %v604
        %614 = vmatpush.bf16.msra.mxu0 %v603
        %615 = vmatpush.bf16.msra.mxu0 %v602
        %616 = vmatpush.bf16.msra.mxu0 %v601
        %617 = vmatpush.bf16.msra.mxu0 %v600
        %618 = vmatpush.bf16.msra.mxu0 %v599
        %619 = vmatpush.bf16.msra.mxu0 %v598
        %620 = vmatpush.bf16.msra.mxu0 %v597
        %621 = vmatmul.bf16.gmra.mxu0 %v531
        %v622 = vpop.f32.mrf.mxu0
        %v623 = vadd.f32 0.0, %v622
        %v624 = vpop.f32.mrf.mxu0
        %v625 = vadd.f32 0.0, %v624
        %626 = vmatmul.bf16.gmra.mxu0 %v547
        %v627 = vpop.f32.mrf.mxu0
        %v628 = vadd.f32 0.0, %v627
        %v629 = vpop.f32.mrf.mxu0
        %v630 = vadd.f32 0.0, %v629
        %631 = vdwg.mxu0
        %v650 = vunpack.c.l.b16 %v492
        %v651 = vunpack.c.l.b16 %v493
        %v652 = vunpack.c.l.b16 %v494
        %v653 = vunpack.c.l.b16 %v495
        %v654 = vunpack.c.l.b16 %v496
        %v655 = vunpack.c.l.b16 %v497
        %v656 = vunpack.c.l.b16 %v498
        %v657 = vunpack.c.l.b16 %v499
        %v658 = vunpack.c.l.b16 %v500
        %v659 = vunpack.c.l.b16 %v501
        %v660 = vunpack.c.l.b16 %v502
        %v661 = vunpack.c.l.b16 %v503
        %v662 = vunpack.c.l.b16 %v504
        %v663 = vunpack.c.l.b16 %v505
        %v664 = vunpack.c.l.b16 %v506
        %v665 = vunpack.c.l.b16 %v507
        %v666 = vpack.c.b16 %v651, %v650
        %v667 = vpack.c.b16 %v653, %v652
        %v668 = vpack.c.b16 %v655, %v654
        %v669 = vpack.c.b16 %v657, %v656
        %v670 = vpack.c.b16 %v659, %v658
        %v671 = vpack.c.b16 %v661, %v660
        %v672 = vpack.c.b16 %v663, %v662
        %v673 = vpack.c.b16 %v665, %v664
        %682 = vmatpush.bf16.msra.mxu0 %v673
        %683 = vmatpush.bf16.msra.mxu0 %v672
        %684 = vmatpush.bf16.msra.mxu0 %v671
        %685 = vmatpush.bf16.msra.mxu0 %v670
        %686 = vmatpush.bf16.msra.mxu0 %v669
        %687 = vmatpush.bf16.msra.mxu0 %v668
        %688 = vmatpush.bf16.msra.mxu0 %v667
        %689 = vmatpush.bf16.msra.mxu0 %v666
        %690 = vmatmul.bf16.gmra.mxu0 %v517
        %v691 = vpop.f32.mrf.mxu0
        %v692 = vadd.f32 %v623, %v691
        %v693 = vpop.f32.mrf.mxu0
        %v694 = vadd.f32 %v625, %v693
        %695 = vmatmul.bf16.gmra.mxu0 %v518
        %v696 = vpop.f32.mrf.mxu0
        %v697 = vadd.f32 %v628, %v696
        %v698 = vpop.f32.mrf.mxu0
        %v699 = vadd.f32 %v630, %v698
        %700 = vdwg.mxu0
        %vm701 = vcmask 1046528
        %v702 = vrot.slane %v517, 1
        %v703 = vrot.slane %v518, 1
        %v704 = vsel %vm701, %v702, %v703
        %v706 = vrot.slane %v539, 1
        %vm707 = vcmask 1046528
        %v710 = vsel %vm707, %v703, %v706
        %s712 = scalar_lea.vmem [#allocation2], 128
        %v713 = vld [vmem:[%s712] sm:$0xf]
        %v714 = vld [vmem:[%s712 + $0x4] sm:$0xf]
        %v715 = vld [vmem:[%s712 + $0x8] sm:$0xf]
        %v716 = vld [vmem:[%s712 + $0xc] sm:$0xf]
        %v717 = vld [vmem:[%s712 + $0x10] sm:$0xf]
        %v718 = vld [vmem:[%s712 + $0x14] sm:$0xf]
        %v719 = vld [vmem:[%s712 + $0x18] sm:$0xf]
        %v720 = vld [vmem:[%s712 + $0x1c] sm:$0xf]
        %v721 = vld [vmem:[%s712 + $0x20] sm:$0xf]
        %v722 = vld [vmem:[%s712 + $0x24] sm:$0xf]
        %v723 = vld [vmem:[%s712 + $0x28] sm:$0xf]
        %v724 = vld [vmem:[%s712 + $0x2c] sm:$0xf]
        %v725 = vld [vmem:[%s712 + $0x30] sm:$0xf]
        %v726 = vld [vmem:[%s712 + $0x34] sm:$0xf]
        %v727 = vld [vmem:[%s712 + $0x38] sm:$0xf]
        %v728 = vld [vmem:[%s712 + $0x3c] sm:$0xf]
        %v745 = vunpack.c.l.b16 %v713
        %v746 = vunpack.c.l.b16 %v714
        %v747 = vunpack.c.l.b16 %v715
        %v748 = vunpack.c.l.b16 %v716
        %v749 = vunpack.c.l.b16 %v717
        %v750 = vunpack.c.l.b16 %v718
        %v751 = vunpack.c.l.b16 %v719
        %v752 = vunpack.c.l.b16 %v720
        %v753 = vunpack.c.l.b16 %v721
        %v754 = vunpack.c.l.b16 %v722
        %v755 = vunpack.c.l.b16 %v723
        %v756 = vunpack.c.l.b16 %v724
        %v757 = vunpack.c.l.b16 %v725
        %v758 = vunpack.c.l.b16 %v726
        %v759 = vunpack.c.l.b16 %v727
        %v760 = vunpack.c.l.b16 %v728
        %v761 = vpack.c.b16 %v746, %v745
        %v762 = vpack.c.b16 %v748, %v747
        %v763 = vpack.c.b16 %v750, %v749
        %v764 = vpack.c.b16 %v752, %v751
        %v765 = vpack.c.b16 %v754, %v753
        %v766 = vpack.c.b16 %v756, %v755
        %v767 = vpack.c.b16 %v758, %v757
        %v768 = vpack.c.b16 %v760, %v759
        %777 = vmatpush.bf16.msra.mxu0 %v768
        %778 = vmatpush.bf16.msra.mxu0 %v767
        %779 = vmatpush.bf16.msra.mxu0 %v766
        %780 = vmatpush.bf16.msra.mxu0 %v765
        %781 = vmatpush.bf16.msra.mxu0 %v764
        %782 = vmatpush.bf16.msra.mxu0 %v763
        %783 = vmatpush.bf16.msra.mxu0 %v762
        %784 = vmatpush.bf16.msra.mxu0 %v761
        %785 = vmatmul.bf16.gmra.mxu0 %v704
        %v786 = vpop.f32.mrf.mxu0
        %v787 = vadd.f32 0.0, %v786
        %v788 = vpop.f32.mrf.mxu0
        %v789 = vadd.f32 0.0, %v788
        %790 = vmatmul.bf16.gmra.mxu0 %v710
        %v791 = vpop.f32.mrf.mxu0
        %v792 = vadd.f32 0.0, %v791
        %v793 = vpop.f32.mrf.mxu0
        %v794 = vadd.f32 0.0, %v793
        %795 = vdwg.mxu0
        %v796 = vadd.f32 %v692, %v787
        %v797 = vadd.f32 %v694, %v789
        %v798 = vadd.f32 %v697, %v792
        %v799 = vadd.f32 %v699, %v794
        %v800 = vld [vmem:[%s3] sm:$0x1]
        %v802 = vperm.slane %v800, 0
        %v804 = vadd.f32 %v796, %v802
        %v805 = vadd.f32 %v797, %v802
        %v806 = vadd.f32 %v798, %v802
        %v807 = vadd.f32 %v799, %v802
        %s808 = sld [smem:[#allocation7]]
        %vm809 = vcmp.ge.f32.partialorder %v804, 0.0
        %vm810 = vcmp.ge.f32.partialorder %v805, 0.0
        %vm811 = vcmp.ge.f32.partialorder %v806, 0.0
        %vm812 = vcmp.ge.f32.partialorder %v807, 0.0
        %v813 = vstv %s808
        %v814 = vmul.f32 %v813, %v804
        %v815 = vmul.f32 %v813, %v805
        %v816 = vmul.f32 %v813, %v806
        %v817 = vmul.f32 %v813, %v807
        %v818 = vsel %vm809, %v804, %v814
        %v819 = vsel %vm810, %v805, %v815
        %v820 = vsel %vm811, %v806, %v816
        %v821 = vsel %vm812, %v807, %v817
        %v822 = vpack.c.bf16 %v819, %v818
        %v823 = vpack.c.bf16 %v821, %v820
        %v824 = vld [vmem:[%s4] sm:$0xf]
        %v825 = vld [vmem:[%s4 + $0x4] sm:$0xf]
        %v826 = vld [vmem:[%s4 + $0x8] sm:$0xf]
        %v827 = vld [vmem:[%s4 + $0xc] sm:$0xf]
        %v828 = vld [vmem:[%s4 + $0x10] sm:$0xf]
        %v829 = vld [vmem:[%s4 + $0x14] sm:$0xf]
        %v830 = vld [vmem:[%s4 + $0x18] sm:$0xf]
        %v831 = vld [vmem:[%s4 + $0x1c] sm:$0xf]
        %v832 = vld [vmem:[%s4 + $0x20] sm:$0xf]
        %v833 = vld [vmem:[%s4 + $0x24] sm:$0xf]
        %v834 = vld [vmem:[%s4 + $0x28] sm:$0xf]
        %v835 = vld [vmem:[%s4 + $0x2c] sm:$0xf]
        %v836 = vld [vmem:[%s4 + $0x30] sm:$0xf]
        %v837 = vld [vmem:[%s4 + $0x34] sm:$0xf]
        %v838 = vld [vmem:[%s4 + $0x38] sm:$0xf]
        %v839 = vld [vmem:[%s4 + $0x3c] sm:$0xf]
        %v840 = vld [vmem:[%s5] sm:$0x1]
        %v842 = vperm.slane %v840, 0
        %v860 = vunpack.c.l.b16 %v824
        %v861 = vunpack.c.l.b16 %v825
        %v862 = vunpack.c.l.b16 %v826
        %v863 = vunpack.c.l.b16 %v827
        %v864 = vunpack.c.l.b16 %v828
        %v865 = vunpack.c.l.b16 %v829
        %v866 = vunpack.c.l.b16 %v830
        %v867 = vunpack.c.l.b16 %v831
        %v868 = vunpack.c.l.b16 %v832
        %v869 = vunpack.c.l.b16 %v833
        %v870 = vunpack.c.l.b16 %v834
        %v871 = vunpack.c.l.b16 %v835
        %v872 = vunpack.c.l.b16 %v836
        %v873 = vunpack.c.l.b16 %v837
        %v874 = vunpack.c.l.b16 %v838
        %v875 = vunpack.c.l.b16 %v839
        %v876 = vpack.c.b16 %v861, %v860
        %v877 = vpack.c.b16 %v863, %v862
        %v878 = vpack.c.b16 %v865, %v864
        %v879 = vpack.c.b16 %v867, %v866
        %v880 = vpack.c.b16 %v869, %v868
        %v881 = vpack.c.b16 %v871, %v870
        %v882 = vpack.c.b16 %v873, %v872
        %v883 = vpack.c.b16 %v875, %v874
        %892 = vmatpush.bf16.msra.mxu0 %v883
        %893 = vmatpush.bf16.msra.mxu0 %v882
        %894 = vmatpush.bf16.msra.mxu0 %v881
        %895 = vmatpush.bf16.msra.mxu0 %v880
        %896 = vmatpush.bf16.msra.mxu0 %v879
        %897 = vmatpush.bf16.msra.mxu0 %v878
        %898 = vmatpush.bf16.msra.mxu0 %v877
        %899 = vmatpush.bf16.msra.mxu0 %v876
        %900 = vmatmul.bf16.gmra.mxu0 %v822
        %v901 = vpop.f32.mrf.mxu0
        %v902 = vadd.f32 %v842, %v901
        %v903 = vpop.f32.mrf.mxu0
        %v904 = vadd.f32 %v842, %v903
        %905 = vmatmul.bf16.gmra.mxu0 %v823
        %v906 = vpop.f32.mrf.mxu0
        %v907 = vadd.f32 %v842, %v906
        %v908 = vpop.f32.mrf.mxu0
        %v909 = vadd.f32 %v842, %v908
        %910 = vdwg.mxu0
        %v911 = vlaneseq
        %v912 = vand.u32 %v911, 127
        %vm913 = vcmp.lt.s32.totalorder %v912, 32
        %v914 = vsel %vm913, 1, 0
        %v915 = vcvt.s32.f32 %v914
        %916 = vadd.xlane.f32.xlu0 %v902
        %v917 = vpop.xlane.xlu0 %916
        %918 = vadd.xlane.f32.xlu0 %v904
        %v919 = vpop.xlane.xlu0 %918
        %920 = vadd.xlane.f32.xlu0 %v907
        %v921 = vpop.xlane.xlu0 %920
        %922 = vadd.xlane.f32.xlu0 %v909
        %v923 = vpop.xlane.xlu0 %922
        %v924 = vmul.f32 %v917, 0.03125
        %v925 = vmul.f32 %v919, 0.03125
        %v926 = vmul.f32 %v921, 0.03125
        %v927 = vmul.f32 %v923, 0.03125
        %v928 = vsub.f32 %v902, %v924
        %v929 = vsub.f32 %v904, %v925
        %v930 = vsub.f32 %v907, %v926
        %v931 = vsub.f32 %v909, %v927
        %v932 = vmul.f32 %v928, %v915
        %v933 = vmul.f32 %v929, %v915
        %v934 = vmul.f32 %v930, %v915
        %v935 = vmul.f32 %v931, %v915
        %v936 = vmul.f32 %v932, %v932
        %v937 = vmul.f32 %v933, %v933
        %v938 = vmul.f32 %v934, %v934
        %v939 = vmul.f32 %v935, %v935
        %940 = vadd.xlane.f32.xlu0 %v936
        %v941 = vpop.xlane.xlu0 %940
        %942 = vadd.xlane.f32.xlu0 %v937
        %v943 = vpop.xlane.xlu0 %942
        %944 = vadd.xlane.f32.xlu0 %v938
        %v945 = vpop.xlane.xlu0 %944
        %946 = vadd.xlane.f32.xlu0 %v939
        %v947 = vpop.xlane.xlu0 %946
        %v948 = vmul.f32 %v941, 0.03125
        %v949 = vmul.f32 %v943, 0.03125
        %v950 = vmul.f32 %v945, 0.03125
        %v951 = vmul.f32 %v947, 0.03125
        %v952 = vrsqrt.pop %v948
        %v953 = vmul.f32 %v952, %v948
        %v954 = vmul.f32 %v953, %v952
        %v955 = vmul.f32 0.5, %v954
        %v956 = vsub.f32 1.5, %v955
        %v957 = vmul.f32 %v952, %v956
        %v958 = vmul.f32 %v948, %v957
        %vm959 = vcmp.eq.f32.partialorder %v948, inf
        %v960 = vsel %vm959, %v948, %v958
        %vm961 = vcmp.eq.f32.partialorder %v948, 0.0
        %v962 = vand.u32 %v948, 2147483648
        %v963 = vsel %vm961, %v962, %v960
        %v964 = vrsqrt.pop %v949
        %v965 = vmul.f32 %v964, %v949
        %v966 = vmul.f32 %v965, %v964
        %v967 = vmul.f32 0.5, %v966
        %v968 = vsub.f32 1.5, %v967
        %v969 = vmul.f32 %v964, %v968
        %v970 = vmul.f32 %v949, %v969
        %vm971 = vcmp.eq.f32.partialorder %v949, inf
        %v972 = vsel %vm971, %v949, %v970
        %vm973 = vcmp.eq.f32.partialorder %v949, 0.0
        %v974 = vand.u32 %v949, 2147483648
        %v975 = vsel %vm973, %v974, %v972
        %v976 = vrsqrt.pop %v950
        %v977 = vmul.f32 %v976, %v950
        %v978 = vmul.f32 %v977, %v976
        %v979 = vmul.f32 0.5, %v978
        %v980 = vsub.f32 1.5, %v979
        %v981 = vmul.f32 %v976, %v980
        %v982 = vmul.f32 %v950, %v981
        %vm983 = vcmp.eq.f32.partialorder %v950, inf
        %v984 = vsel %vm983, %v950, %v982
        %vm985 = vcmp.eq.f32.partialorder %v950, 0.0
        %v986 = vand.u32 %v950, 2147483648
        %v987 = vsel %vm985, %v986, %v984
        %v988 = vrsqrt.pop %v951
        %v989 = vmul.f32 %v988, %v951
        %v990 = vmul.f32 %v989, %v988
        %v991 = vmul.f32 0.5, %v990
        %v992 = vsub.f32 1.5, %v991
        %v993 = vmul.f32 %v988, %v992
        %v994 = vmul.f32 %v951, %v993
        %vm995 = vcmp.eq.f32.partialorder %v951, inf
        %v996 = vsel %vm995, %v951, %v994
        %vm997 = vcmp.eq.f32.partialorder %v951, 0.0
        %v998 = vand.u32 %v951, 2147483648
        %v999 = vsel %vm997, %v998, %v996
        %v1000 = vadd.f32 %v963, 0.0001
        %v1001 = vadd.f32 %v975, 0.0001
        %v1002 = vadd.f32 %v987, 0.0001
        %v1003 = vadd.f32 %v999, 0.0001
        %v1004 = vrcp.pop %v1000
        %v1005 = vrcp.pop %v1001
        %v1006 = vrcp.pop %v1002
        %v1007 = vrcp.pop %v1003
        %v1008 = vmul.f32 %v932, %v1004
        %v1009 = vmul.f32 %v933, %v1005
        %v1010 = vmul.f32 %v934, %v1006
        %v1011 = vmul.f32 %v935, %v1007
        %v1012 = vld [vmem:[#allocation5] sm:$0x1]
        %v1014 = vperm.slane %v1012, 0
        %v1016 = vmul.f32 %v1014, %v1008
        %v1017 = vmul.f32 %v1014, %v1009
        %v1018 = vmul.f32 %v1014, %v1010
        %v1019 = vmul.f32 %v1014, %v1011
        %v1020 = vld [vmem:[%s7] sm:$0x1]
        %v1022 = vperm.slane %v1020, 0
        %v1024 = vadd.f32 %v1016, %v1022
        %v1025 = vadd.f32 %v1017, %v1022
        %v1026 = vadd.f32 %v1018, %v1022
        %v1027 = vadd.f32 %v1019, %v1022
        %s1028 = sld [smem:[#allocation7 + $0x1]]
        %vm1029 = vcmp.ge.f32.partialorder %v1024, 0.0
        %vm1030 = vcmp.ge.f32.partialorder %v1025, 0.0
        %vm1031 = vcmp.ge.f32.partialorder %v1026, 0.0
        %vm1032 = vcmp.ge.f32.partialorder %v1027, 0.0
        %v1033 = vstv %s1028
        %v1034 = vmul.f32 %v1033, %v1024
        %v1035 = vmul.f32 %v1033, %v1025
        %v1036 = vmul.f32 %v1033, %v1026
        %v1037 = vmul.f32 %v1033, %v1027
        %v1038 = vsel %vm1029, %v1024, %v1034
        %v1039 = vsel %vm1030, %v1025, %v1035
        %v1040 = vsel %vm1031, %v1026, %v1036
        %v1041 = vsel %vm1032, %v1027, %v1037
        %v1042 = vpack.c.bf16 %v1038, %v1038
        %v1043 = vpack.c.bf16 %v1039, %v1039
        %v1044 = vpack.c.bf16 %v1040, %v1040
        %v1045 = vpack.c.bf16 %v1041, %v1041
        %1046 = vst [vmem:[%s486] sm:$0xf] %v1042
        %1047 = vst [vmem:[%s486 + $0x4] sm:$0xf] %v1043
        %1048 = vst [vmem:[%s486 + $0x8] sm:$0xf] %v1044
        %1049 = vst [vmem:[%s486 + $0xc] sm:$0xf] %v1045
        %s1050 = smul.u32 4, %s28
        %p1051 = scmp.lt.s32.totalorder %s27, 1
        %s1052 = scalar_select %p1051, %s27, 1
        %p1053 = scmp.lt.s32.totalorder %s1050, 3
        %s1054 = scalar_select %p1053, %s1050, 3
        %s1055 = smul.addr %s1052, 4
        %s1056 = sadd.s32 %s1054, %s1055
        %s1057 = smul.addr %s1056, 4
        %s1058 = scalar_lea.vmem %s9, %s1057
        // Predicated region
        $region69: #{_lambda_.3} parent=55 // pred_check
          %p1059 = pneg %p262
        $region70: #{_lambda_.3} parent=55 // pred_check_branch
          %1061 = sbr.rel (%p1059) target = $region72
        $region71: #{_lambda_.3} parent=55 // pred_region
          %s1062 = smul.u32 4, %s28
        $region72: #{_lambda_.3} parent=55 // pred_fallthru
          _
      $region56: #{_lambda_.3} parent=5 // pred_fallthru
        _
      %p1063 = scmp.le.s32.totalorder 2, %s18
      // Predicated region
      $region73: #{_lambda_.3} parent=5 // pred_check
        %p1064 = pneg %p1063
      $region74: #{_lambda_.3} parent=5 // pred_check_branch
        %1066 = sbr.rel (%p1064) target = $region76
      $region75: #{_lambda_.3} parent=5 // pred_region
        %s1067 = ssub.s32 %s18, 2
        // Predicated region
        $region77: #{_lambda_.3} parent=75 // pred_check
          %p1068 = pneg %p268
        $region78: #{_lambda_.3} parent=75 // pred_check_branch
          %1070 = sbr.rel (%p1068) target = $region80
        $region79: #{_lambda_.3} parent=75 // pred_region
          %s1071 = smul.u32 4, %s30
          %p1072 = scmp.lt.s32.totalorder %s29, 1
          %s1073 = scalar_select %p1072, %s29, 1
          %p1074 = scmp.lt.s32.totalorder %s1071, 3
          %s1075 = scalar_select %p1074, %s1071, 3
          %s1076 = smul.addr %s1073, 4
          %s1077 = sadd.s32 %s1075, %s1076
          %s1078 = smul.addr %s1077, 4
          %s1079 = scalar_lea.vmem %s9, %s1078
        $region80: #{_lambda_.3} parent=75 // pred_fallthru
          _
      $region76: #{_lambda_.3} parent=5 // pred_fallthru
        _
    $region6: #{_lambda_.3} parent=1 // loop_footer
      %s22 = sadd.s32 1, %s18
    $region7: #{_lambda_.3} parent=1 // loop_footer_branch
      %17 = sbr.rel target = $region3
    $region8: #{_lambda_.3} parent=1 // loop_exit
      _
    %1080 = vsyncpa [#allocation3], 1
    %s1081 = scalar_lea.sflag [#allocation3], 1
    %1082 = vsyncpa %s1081, 1
    %1083 = vsyncpa [#allocation6], 1
    %1084 = vsyncpa [#allocation4], 1
    %s1085 = scalar_lea.sflag [#allocation4], 1
    %1086 = vsyncpa %s1085, 1

</llo_original>
